<compile_context>
chip_gen: v7x
topology: tpu7x:2x2x1
jax: 0.10.0
libtpu: 0.0.40
codegen_flags: <defaults>
</compile_context>

<pallas_src>
import jax
import jax.numpy as jnp
from jax import lax
from jax.experimental import pallas as pl
from jax.experimental.pallas import tpu as pltpu


def _round_up(v, m):
    return (v + m - 1) // m * m


# --------------------------------------------------------------------------
# Kernel 1: ChebConv(F -> H) + ReLU, and pre-applies layer-2's lins[1]:
#   h_i  = relu(x_i @ W10 - dinv_i * (A_i @ (dinv*x)) @ W11 + b1)
#   ps_i = dinv_i * (h_i @ W21)        (column-scaled, ready for layer 2)
# Grid = (rows, K); the propagation A_i @ xs accumulates over K in scratch.
# --------------------------------------------------------------------------
def _cheb1_kernel(dinv_ref, x_ref, xs_ref, adj_ref, w10_ref, w11_ref, b1_ref,
                  w21_ref, h_ref, ps_ref, acc_ref):
    k = pl.program_id(1)

    @pl.when(k == 0)
    def _init():
        acc_ref[...] = jnp.zeros_like(acc_ref)

    a = adj_ref[...].astype(jnp.bfloat16)          # int8 0/1 -> bf16 (exact)
    acc_ref[...] += jnp.dot(a, xs_ref[...], preferred_element_type=jnp.float32)

    @pl.when(k == pl.num_programs(1) - 1)
    def _finalize():
        dinv_i = dinv_ref[...]                                     # [tm, 1] f32
        tx1 = ((-dinv_i) * acc_ref[...]).astype(jnp.bfloat16)      # [tm, Fp]
        h = jnp.dot(x_ref[...], w10_ref[...],
                    preferred_element_type=jnp.float32)
        h = h + jnp.dot(tx1, w11_ref[...],
                        preferred_element_type=jnp.float32)
        h = jnp.maximum(h + b1_ref[...], 0.0)                      # [tm, Hp] f32
        h_bf = h.astype(jnp.bfloat16)
        h_ref[...] = h_bf
        # Pre-apply layer-2 lins[1] + the column D^-1/2 scale so kernel 2's
        # propagation contracts over the (smaller) output-feature dim.
        p = jnp.dot(h_bf, w21_ref[...], preferred_element_type=jnp.float32)
        ps_ref[...] = (dinv_i * p).astype(jnp.bfloat16)            # [tm, Op]


# --------------------------------------------------------------------------
# Kernel 2: ChebConv(H -> O) + ReLU using the pre-scaled projection ps:
#   out_i = relu(h_i @ W20 - dinv_i * (A_i @ ps) + b2)
# --------------------------------------------------------------------------
def _cheb2_kernel(dinv_ref, h_ref, ps_ref, adj_ref, w20_ref, b2_ref,
                  out_ref, acc_ref):
    k = pl.program_id(1)

    @pl.when(k == 0)
    def _init():
        acc_ref[...] = jnp.zeros_like(acc_ref)

    a = adj_ref[...].astype(jnp.bfloat16)
    acc_ref[...] += jnp.dot(a, ps_ref[...], preferred_element_type=jnp.float32)

    @pl.when(k == pl.num_programs(1) - 1)
    def _finalize():
        dinv_i = dinv_ref[...]                                     # [tm, 1] f32
        out = jnp.dot(h_ref[...], w20_ref[...],
                      preferred_element_type=jnp.float32)
        out = jnp.maximum(out - dinv_i * acc_ref[...] + b2_ref[...], 0.0)
        out_ref[...] = out.astype(out_ref.dtype)


# --------------------------------------------------------------------------
# Generation-aware VMEM budget & tile selection.
# --------------------------------------------------------------------------
def _vmem_budget_bytes():
    try:
        cap = int(pltpu.get_tpu_info().vmem_capacity_bytes)
    except Exception:
        cap = 64 << 20
    if cap >= (96 << 20):
        return 100 << 20   # v5e / v6e: 128 MiB physical -> use ~100 MiB
    return 48 << 20        # v7x (64 MiB physical) or unknown: leave headroom


def _pick_tiles(n_pad, f_pad, h_pad, o_pad, budget, tm_max, tk_max):
    def footprint(tm, tk):
        # streamed blocks are double-buffered by BlockSpec (x2)
        s1 = 2 * (tm * 512 + tm * f_pad * 2 + tk * f_pad * 2 + tm * tk
                  + tm * h_pad * 2 + tm * o_pad * 2)
        r1 = (2 * f_pad * h_pad * 2 + h_pad * o_pad * 2 + 8 * h_pad * 4
              + tm * f_pad * 4)
        s2 = 2 * (tm * 512 + tm * h_pad * 2 + tk * o_pad * 2 + tm * tk
                  + tm * o_pad * 4)
        r2 = h_pad * o_pad * 2 + 8 * o_pad * 4 + tm * o_pad * 4
        return max(s1 + r1, s2 + r2)

    # >= 2 parallel row steps whenever possible (v7x megacore); tm multiple of
    # 32 also satisfies the int8 (32,128) sublane packing of the adj tile.
    tm_cands = [t for t in (512, 256, 128)
                if t <= tm_max and n_pad % t == 0
                and (n_pad // t >= 2 or t == 128)]
    if not tm_cands:
        tm_cands = [128]
    tk_cands = sorted({t for t in (n_pad, 16384, 8192, 4096, 2048, 1024, 512,
                                   256, 128)
                       if t <= min(n_pad, tk_max) and n_pad % t == 0},
                      reverse=True)
    for tk in tk_cands:          # prefer full row strip, then largest tm
        for tm in tm_cands:
            if footprint(tm, tk) <= 0.8 * budget:
                return tm, tk
    # TODO(synk): also tile the feature dims for extremely wide layers.
    return 128, 128


# --------------------------------------------------------------------------
# Wrapper: padding, weight prep, two pallas_calls.
# --------------------------------------------------------------------------
def gcn_forward(x, adj, params, *, binary_adj=True, tm_max=512, tk_max=None):
    """x: [N, nfeat] f32, adj: [N, N] (symmetric, no self-loops).

    binary_adj=True streams the adjacency as int8 (exact for 0/1 graphs);
    set False for weighted adjacencies (streamed bf16).  Returns [N, nout].
    """
    n, nfeat = x.shape
    nhid = params["w10"].shape[1]
    nout = params["w20"].shape[1]
    f32, bf16 = jnp.float32, jnp.bfloat16

    f_pad = _round_up(nfeat, 128)
    h_pad = _round_up(nhid, 128)
    o_pad = _round_up(nout, 128)
    n_pad = _round_up(n, 128)

    budget = _vmem_budget_bytes()
    tk_cap = max(int(tk_max), 128) if tk_max is not None else (1 << 30)
    tm, tk = _pick_tiles(n_pad, f_pad, h_pad, o_pad, budget, int(tm_max), tk_cap)
    grid = (n_pad // tm, n_pad // tk)

    x = x.astype(f32)
    adj = adj.astype(f32)

    # degree / D^{-1/2} from the UNPADDED adjacency (padded rows -> dinv 0).
    deg = jnp.sum(adj, axis=1, keepdims=True)
    dinv_u = jnp.where(deg > 0.0, lax.rsqrt(deg), jnp.zeros_like(deg))
    dinv = jnp.zeros((n_pad, 1), f32).at[:n, :].set(dinv_u)

    # Adjacency padded + cast straight to the streamed dtype (no padded f32
    # intermediate).  int8 is exact for 0/1 graphs.
    adj_dtype = jnp.int8 if binary_adj else bf16
    ap = jnp.zeros((n_pad, n_pad), adj_dtype).at[:n, :n].set(
        adj.astype(adj_dtype))

    # Row features (bf16, streamed by row tile) and column-scaled features
    # (bf16, streamed by K tile) -- the rescale/cast is hoisted out of the
    # kernel, done exactly once here.
    xp = jnp.zeros((n_pad, f_pad), bf16).at[:n, :nfeat].set(x.astype(bf16))
    xs = jnp.zeros((n_pad, f_pad), bf16).at[:n, :nfeat].set(
        (dinv_u * x).astype(bf16))

    w10 = jnp.zeros((f_pad, h_pad), bf16).at[:nfeat, :nhid].set(
        params["w10"].astype(bf16))
    w11 = jnp.zeros((f_pad, h_pad), bf16).at[:nfeat, :nhid].set(
        params["w11"].astype(bf16))
    b1 = jnp.zeros((1, h_pad), f32).at[:, :nhid].set(
        params["b1"].astype(f32).reshape(1, -1))
    w20 = jnp.zeros((h_pad, o_pad), bf16).at[:nhid, :nout].set(
        params["w20"].astype(bf16))
    w21 = jnp.zeros((h_pad, o_pad), bf16).at[:nhid, :nout].set(
        params["w21"].astype(bf16))
    b2 = jnp.zeros((1, o_pad), f32).at[:, :nout].set(
        params["b2"].astype(f32).reshape(1, -1))

    # ---- layer 1 (+ layer-2 lins[1] pre-projection) ------------------------
    h, ps = pl.pallas_call(
        _cheb1_kernel,
        out_shape=(jax.ShapeDtypeStruct((n_pad, h_pad), bf16),
                   jax.ShapeDtypeStruct((n_pad, o_pad), bf16)),
        grid=grid,
        in_specs=[
            pl.BlockSpec((tm, 1), lambda i, k: (i, 0)),          # dinv row tile
            pl.BlockSpec((tm, f_pad), lambda i, k: (i, 0)),      # x row tile
            pl.BlockSpec((tk, f_pad), lambda i, k: (k, 0)),      # dinv*x K tile
            pl.BlockSpec((tm, tk), lambda i, k: (i, k)),         # adj tile
            pl.BlockSpec((f_pad, h_pad), lambda i, k: (0, 0)),   # W10
            pl.BlockSpec((f_pad, h_pad), lambda i, k: (0, 0)),   # W11
            pl.BlockSpec((1, h_pad), lambda i, k: (0, 0)),       # b1
            pl.BlockSpec((h_pad, o_pad), lambda i, k: (0, 0)),   # W21
        ],
        out_specs=(pl.BlockSpec((tm, h_pad), lambda i, k: (i, 0)),
                   pl.BlockSpec((tm, o_pad), lambda i, k: (i, 0))),
        scratch_shapes=[pltpu.VMEM((tm, f_pad), jnp.float32)],
        compiler_params=pltpu.CompilerParams(
            dimension_semantics=("parallel", "arbitrary"),
            vmem_limit_bytes=budget),
    )(dinv, xp, xs, ap, w10, w11, b1, w21)

    # ---- layer 2 -----------------------------------------------------------
    out = pl.pallas_call(
        _cheb2_kernel,
        out_shape=jax.ShapeDtypeStruct((n_pad, o_pad), f32),
        grid=grid,
        in_specs=[
            pl.BlockSpec((tm, 1), lambda i, k: (i, 0)),          # dinv row tile
            pl.BlockSpec((tm, h_pad), lambda i, k: (i, 0)),      # h row tile
            pl.BlockSpec((tk, o_pad), lambda i, k: (k, 0)),      # ps K tile
            pl.BlockSpec((tm, tk), lambda i, k: (i, k)),         # adj tile
            pl.BlockSpec((h_pad, o_pad), lambda i, k: (0, 0)),   # W20
            pl.BlockSpec((1, o_pad), lambda i, k: (0, 0)),       # b2
        ],
        out_specs=pl.BlockSpec((tm, o_pad), lambda i, k: (i, 0)),
        scratch_shapes=[pltpu.VMEM((tm, o_pad), jnp.float32)],
        compiler_params=pltpu.CompilerParams(
            dimension_semantics=("parallel", "arbitrary"),
            vmem_limit_bytes=budget),
    )(dinv, h, ps, ap, w20, b2)

    return out[:n, :nout]


# --------------------------------------------------------------------------
# Parameters / reference / test
# --------------------------------------------------------------------------
def _glorot(key, shape):
    fan_in, fan_out = shape
    limit = jnp.sqrt(6.0 / (fan_in + fan_out))
    return jax.random.uniform(key, shape, jnp.float32, -limit, limit)


def init_params(key, nfeat, nhid, nout):
    k = jax.random.split(key, 4)
    return {
        "w10": _glorot(k[0], (nfeat, nhid)),   # ChebConv1 lins[0]
        "w11": _glorot(k[1], (nfeat, nhid)),   # ChebConv1 lins[1]
        "b1": jnp.zeros((1, nhid), jnp.float32),
        "w20": _glorot(k[2], (nhid, nout)),    # ChebConv2 lins[0]
        "w21": _glorot(k[3], (nhid, nout)),    # ChebConv2 lins[1]
        "b2": jnp.zeros((1, nout), jnp.float32),
    }


def _reference(x, adj, p):
    deg = adj.sum(axis=1, keepdims=True)
    dinv = jnp.where(deg > 0, 1.0 / jnp.sqrt(deg), 0.0)
    l_hat = -(dinv * adj * dinv.T)
    h = jnp.maximum(x @ p["w10"] + (l_hat @ x) @ p["w11"] + p["b1"], 0.0)
    return jnp.maximum(h @ p["w20"] + (l_hat @ h) @ p["w21"] + p["b2"], 0.0)


if __name__ == "__main__":
    # N=500 -> n_pad=512: exercises padding, the multi-row parallel grid
    # (tm=256, 2 row tiles), and (with tk_max=256) the K-tiled accumulator.
    N, NFEAT, NHID, NOUT = 500, 12, 32, 16
    key = jax.random.PRNGKey(0)
    kx, ka, kp = jax.random.split(key, 3)

    x = jax.random.normal(kx, (N, NFEAT), jnp.float32)
    # symmetric 0/1 adjacency with no self-loops (~10% density)
    a = (jax.random.uniform(ka, (N, N)) > 0.95).astype(jnp.float32)
    adj = jnp.clip(a + a.T, 0.0, 1.0) * (1.0 - jnp.eye(N, dtype=jnp.float32))

    params = init_params(kp, NFEAT, NHID, NOUT)
    ref = _reference(x, adj, params)

    # Default tiling: full row strip (tk == n_pad).
    out = jax.block_until_ready(gcn_forward(x, adj, params))
    assert out.shape == (N, NOUT)
    assert jnp.allclose(out, ref, atol=1e-1, rtol=1e-1), (
        f"max abs err {jnp.max(jnp.abs(out - ref))}")

    # K-tiled path: forces multiple k steps -> accumulator init/finalize.
    out_kt = jax.block_until_ready(gcn_forward(x, adj, params, tk_max=256))
    assert jnp.allclose(out_kt, ref, atol=1e-1, rtol=1e-1), (
        f"max abs err {jnp.max(jnp.abs(out_kt - ref))}")

    print("KERNEL_OK")
</pallas_src>

<mosaic_0001>
module attributes {stable_mosaic.version = 11 : i64} {
  func.func @_cheb1_kernel(%arg0: i32, %arg1: i32, %arg2: memref<256x1xf32, #tpu.memory_space<vmem>>, %arg3: memref<256x128xbf16, #tpu.memory_space<vmem>>, %arg4: memref<512x128xbf16, #tpu.memory_space<vmem>>, %arg5: memref<256x512xi8, #tpu.memory_space<vmem>>, %arg6: memref<128x128xbf16, #tpu.memory_space<vmem>>, %arg7: memref<128x128xbf16, #tpu.memory_space<vmem>>, %arg8: memref<1x128xf32, #tpu.memory_space<vmem>>, %arg9: memref<128x128xbf16, #tpu.memory_space<vmem>>, %arg10: memref<256x128xbf16, #tpu.memory_space<vmem>>, %arg11: memref<256x128xbf16, #tpu.memory_space<vmem>>, %arg12: memref<256x128xf32, #tpu.memory_space<vmem>>) attributes {dimension_semantics = [#tpu.dimension_semantics<parallel>, #tpu.dimension_semantics<arbitrary>], iteration_bounds = array<i64: 2, 1>, scalar_prefetch = 0 : i64, scratch_operands = 1 : i64, tpu.core_type = #tpu.core_type<tc>, window_params = [{transform_indices = @transform_0, window_bounds = array<i64: 256, 1>}, {transform_indices = @transform_1, window_bounds = array<i64: 256, 128>}, {transform_indices = @transform_2, window_bounds = array<i64: 512, 128>}, {transform_indices = @transform_3, window_bounds = array<i64: 256, 512>}, {pipeline_mode = #tpu.pipeline_mode<synchronous>, transform_indices = @transform_4, window_bounds = array<i64: 128, 128>}, {pipeline_mode = #tpu.pipeline_mode<synchronous>, transform_indices = @transform_5, window_bounds = array<i64: 128, 128>}, {pipeline_mode = #tpu.pipeline_mode<synchronous>, transform_indices = @transform_6, window_bounds = array<i64: 1, 128>}, {pipeline_mode = #tpu.pipeline_mode<synchronous>, transform_indices = @transform_7, window_bounds = array<i64: 128, 128>}, {transform_indices = @transform_8, window_bounds = array<i64: 256, 128>}, {transform_indices = @transform_9, window_bounds = array<i64: 256, 128>}]} {
    %c0_i32 = arith.constant 0 : i32
    %0 = arith.cmpi eq, %arg1, %c0_i32 : i32
    %1 = arith.extui %0 : i1 to i32
    %c0_i32_0 = arith.constant 0 : i32
    %2 = arith.cmpi ne, %1, %c0_i32_0 : i32
    scf.if %2 {
      %cst_10 = arith.constant 0.000000e+00 : f32
      %13 = vector.broadcast %cst_10 : f32 to vector<256x128xf32>
      %c0_11 = arith.constant 0 : index
      %c0_12 = arith.constant 0 : index
      %14 = vector.load %arg12[%c0_11, %c0_12] : memref<256x128xf32, #tpu.memory_space<vmem>>, vector<256x128xf32>
      tpu.vector_store %arg12[%c0_11, %c0_12], %13 {strides = array<i32>} : memref<256x128xf32, #tpu.memory_space<vmem>>, vector<256x128xf32>,
    } else {
    }
    %c0 = arith.constant 0 : index
    %c0_1 = arith.constant 0 : index
    %3 = vector.load %arg5[%c0, %c0_1] : memref<256x512xi8, #tpu.memory_space<vmem>>, vector<256x512xi8>
    %4 = arith.sitofp %3 : vector<256x512xi8> to vector<256x512xbf16>
    %c0_2 = arith.constant 0 : index
    %c0_3 = arith.constant 0 : index
    %5 = vector.load %arg12[%c0_2, %c0_3] : memref<256x128xf32, #tpu.memory_space<vmem>>, vector<256x128xf32>
    %c0_4 = arith.constant 0 : index
    %c0_5 = arith.constant 0 : index
    %6 = vector.load %arg4[%c0_4, %c0_5] : memref<512x128xbf16, #tpu.memory_space<vmem>>, vector<512x128xbf16>
    %cst = arith.constant dense<0.000000e+00> : vector<256x128xf32>
    %7 = tpu.matmul %4, %6, %cst {dimension_numbers = #tpu.dot_dimension_numbers<[1], [0], [0], [1], [0, 0, 1, 1], [], []>} : vector<256x512xbf16>, vector<512x128xbf16>, vector<256x128xf32> -> vector<256x128xf32>
    %8 = arith.addf %5, %7 : vector<256x128xf32>
    %c0_6 = arith.constant 0 : index
    %c0_7 = arith.constant 0 : index
    %9 = vector.load %arg12[%c0_6, %c0_7] : memref<256x128xf32, #tpu.memory_space<vmem>>, vector<256x128xf32>
    tpu.vector_store %arg12[%c0_6, %c0_7], %8 {strides = array<i32>} : memref<256x128xf32, #tpu.memory_space<vmem>>, vector<256x128xf32>,
    %c0_i32_8 = arith.constant 0 : i32
    %10 = arith.cmpi eq, %arg1, %c0_i32_8 : i32
    %11 = arith.extui %10 : i1 to i32
    %c0_i32_9 = arith.constant 0 : i32
    %12 = arith.cmpi ne, %11, %c0_i32_9 : i32
    scf.if %12 {
      %c0_10 = arith.constant 0 : index
      %c0_11 = arith.constant 0 : index
      %13 = vector.load %arg2[%c0_10, %c0_11] : memref<256x1xf32, #tpu.memory_space<vmem>>, vector<256x1xf32>
      %cst_12 = arith.constant 0.000000e+00 : f32
      %14 = vector.broadcast %cst_12 : f32 to vector<256x1xf32>
      %15 = arith.subf %14, %13 : vector<256x1xf32>
      %c0_13 = arith.constant 0 : index
      %c0_14 = arith.constant 0 : index
      %16 = vector.load %arg12[%c0_13, %c0_14] : memref<256x128xf32, #tpu.memory_space<vmem>>, vector<256x128xf32>
      %17 = vector.broadcast %15 : vector<256x1xf32> to vector<256x128xf32>
      %18 = arith.mulf %17, %16 : vector<256x128xf32>
      %19 = arith.truncf %18 : vector<256x128xf32> to vector<256x128xbf16>
      %c0_15 = arith.constant 0 : index
      %c0_16 = arith.constant 0 : index
      %20 = vector.load %arg3[%c0_15, %c0_16] : memref<256x128xbf16, #tpu.memory_space<vmem>>, vector<256x128xbf16>
      %c0_17 = arith.constant 0 : index
      %c0_18 = arith.constant 0 : index
      %21 = vector.load %arg6[%c0_17, %c0_18] : memref<128x128xbf16, #tpu.memory_space<vmem>>, vector<128x128xbf16>
      %cst_19 = arith.constant dense<0.000000e+00> : vector<256x128xf32>
      %22 = tpu.matmul %20, %21, %cst_19 {dimension_numbers = #tpu.dot_dimension_numbers<[1], [0], [0], [1], [0, 0, 1, 1], [], []>} : vector<256x128xbf16>, vector<128x128xbf16>, vector<256x128xf32> -> vector<256x128xf32>
      %c0_20 = arith.constant 0 : index
      %c0_21 = arith.constant 0 : index
      %23 = vector.load %arg7[%c0_20, %c0_21] : memref<128x128xbf16, #tpu.memory_space<vmem>>, vector<128x128xbf16>
      %cst_22 = arith.constant dense<0.000000e+00> : vector<256x128xf32>
      %24 = tpu.matmul %19, %23, %cst_22 {dimension_numbers = #tpu.dot_dimension_numbers<[1], [0], [0], [1], [0, 0, 1, 1], [], []>} : vector<256x128xbf16>, vector<128x128xbf16>, vector<256x128xf32> -> vector<256x128xf32>
      %25 = arith.addf %22, %24 : vector<256x128xf32>
      %c0_23 = arith.constant 0 : index
      %c0_24 = arith.constant 0 : index
      %26 = vector.load %arg8[%c0_23, %c0_24] : memref<1x128xf32, #tpu.memory_space<vmem>>, vector<1x128xf32>
      %27 = vector.broadcast %26 : vector<1x128xf32> to vector<256x128xf32>
      %28 = arith.addf %25, %27 : vector<256x128xf32>
      %cst_25 = arith.constant 0.000000e+00 : f32
      %29 = vector.broadcast %cst_25 : f32 to vector<256x128xf32>
      %30 = arith.maximumf %28, %29 : vector<256x128xf32>
      %31 = arith.truncf %30 : vector<256x128xf32> to vector<256x128xbf16>
      %c0_26 = arith.constant 0 : index
      %c0_27 = arith.constant 0 : index
      %32 = vector.load %arg10[%c0_26, %c0_27] : memref<256x128xbf16, #tpu.memory_space<vmem>>, vector<256x128xbf16>
      tpu.vector_store %arg10[%c0_26, %c0_27], %31 {strides = array<i32>} : memref<256x128xbf16, #tpu.memory_space<vmem>>, vector<256x128xbf16>,
      %c0_28 = arith.constant 0 : index
      %c0_29 = arith.constant 0 : index
      %33 = vector.load %arg9[%c0_28, %c0_29] : memref<128x128xbf16, #tpu.memory_space<vmem>>, vector<128x128xbf16>
      %cst_30 = arith.constant dense<0.000000e+00> : vector<256x128xf32>
      %34 = tpu.matmul %31, %33, %cst_30 {dimension_numbers = #tpu.dot_dimension_numbers<[1], [0], [0], [1], [0, 0, 1, 1], [], []>} : vector<256x128xbf16>, vector<128x128xbf16>, vector<256x128xf32> -> vector<256x128xf32>
      %35 = vector.broadcast %13 : vector<256x1xf32> to vector<256x128xf32>
      %36 = arith.mulf %35, %34 : vector<256x128xf32>
      %37 = arith.truncf %36 : vector<256x128xf32> to vector<256x128xbf16>
      %c0_31 = arith.constant 0 : index
      %c0_32 = arith.constant 0 : index
      %38 = vector.load %arg11[%c0_31, %c0_32] : memref<256x128xbf16, #tpu.memory_space<vmem>>, vector<256x128xbf16>
      tpu.vector_store %arg11[%c0_31, %c0_32], %37 {strides = array<i32>} : memref<256x128xbf16, #tpu.memory_space<vmem>>, vector<256x128xbf16>,
    } else {
    }
    return
  }
  func.func @transform_0(%arg0: i32, %arg1: i32) -> (i32, i32) {
    %c0_i32 = arith.constant 0 : i32
    %c0_i32_0 = arith.constant 0 : i32
    return %arg0, %c0_i32 : i32, i32
  }
  func.func @transform_1(%arg0: i32, %arg1: i32) -> (i32, i32) {
    %c0_i32 = arith.constant 0 : i32
    %c0_i32_0 = arith.constant 0 : i32
    return %arg0, %c0_i32 : i32, i32
  }
  func.func @transform_2(%arg0: i32, %arg1: i32) -> (i32, i32) {
    %c0_i32 = arith.constant 0 : i32
    %c0_i32_0 = arith.constant 0 : i32
    return %arg1, %c0_i32 : i32, i32
  }
  func.func @transform_3(%arg0: i32, %arg1: i32) -> (i32, i32) {
    %c0_i32 = arith.constant 0 : i32
    return %arg0, %arg1 : i32, i32
  }
  func.func @transform_4(%arg0: i32, %arg1: i32) -> (i32, i32) {
    %c0_i32 = arith.constant 0 : i32
    %c0_i32_0 = arith.constant 0 : i32
    %c0_i32_1 = arith.constant 0 : i32
    return %c0_i32, %c0_i32_0 : i32, i32
  }
  func.func @transform_5(%arg0: i32, %arg1: i32) -> (i32, i32) {
    %c0_i32 = arith.constant 0 : i32
    %c0_i32_0 = arith.constant 0 : i32
    %c0_i32_1 = arith.constant 0 : i32
    return %c0_i32, %c0_i32_0 : i32, i32
  }
  func.func @transform_6(%arg0: i32, %arg1: i32) -> (i32, i32) {
    %c0_i32 = arith.constant 0 : i32
    %c0_i32_0 = arith.constant 0 : i32
    %c0_i32_1 = arith.constant 0 : i32
    return %c0_i32, %c0_i32_0 : i32, i32
  }
  func.func @transform_7(%arg0: i32, %arg1: i32) -> (i32, i32) {
    %c0_i32 = arith.constant 0 : i32
    %c0_i32_0 = arith.constant 0 : i32
    %c0_i32_1 = arith.constant 0 : i32
    return %c0_i32, %c0_i32_0 : i32, i32
  }
  func.func @transform_8(%arg0: i32, %arg1: i32) -> (i32, i32) {
    %c0_i32 = arith.constant 0 : i32
    %c0_i32_0 = arith.constant 0 : i32
    return %arg0, %c0_i32 : i32, i32
  }
  func.func @transform_9(%arg0: i32, %arg1: i32) -> (i32, i32) {
    %c0_i32 = arith.constant 0 : i32
    %c0_i32_0 = arith.constant 0 : i32
    return %arg0, %c0_i32 : i32, i32
  }
}

</mosaic_0001>

<llo_original>
// kernel: tpu_custom_call.1
$region0: #{tpu_custom_call.1}
  #allocation0 [shape = 'u32[]', space=smem, size = 0x4, offset = 0x4, fixed_abs, tag = 'smem constant byte address 0x4 - core index']
  #allocation1 [shape = 'u32[144,128]{1,0:T(1,128)}', space=vmem, size = 0x12000, scoped, tag = 'internal scratch']
  #allocation2 [shape = 'f32[256,128]{1,0:T(8,128)}', space=vmem, size = 0x20000, scoped, tag = 'scratch operand']
  %s0 = inlined_call_operand.vmem [shape: f32[512,1], index: 0, kind: input, shape index: {}]
  %s1 = inlined_call_operand.hbm [shape: bf16[512,128], index: 1, kind: input, shape index: {}]
  %s2 = inlined_call_operand.hbm [shape: bf16[512,128], index: 2, kind: input, shape index: {}]
  %s3 = inlined_call_operand.vmem [shape: s8[512,512], index: 3, kind: input, shape index: {}]
  %s4 = inlined_call_operand.hbm [shape: bf16[128,128], index: 4, kind: input, shape index: {}]
  %s5 = inlined_call_operand.hbm [shape: bf16[128,128], index: 5, kind: input, shape index: {}]
  %s6 = inlined_call_operand.vmem [shape: f32[1,128], index: 6, kind: input, shape index: {}]
  %s7 = inlined_call_operand.hbm [shape: bf16[128,128], index: 7, kind: input, shape index: {}]
  %s8 = inlined_call_operand.hbm [shape: bf16[512,128], index: 8, kind: output, shape index: {0}]
  %s9 = inlined_call_operand.hbm [shape: bf16[512,128], index: 9, kind: output, shape index: {1}]
  %10 = xla_tuple %s8, %s9
  %s11 = sld [smem:[#allocation0]]
  $region101: #{tpu_custom_call.1} parent=0
    _
  %s13 = ssub.s32 1, %s11
  %s14 = scalar_select 0, %s13, %s11
  $region1: #{tpu_custom_call.1} parent=0
    #allocation3 [shape = 'u8[131072]{0}', space=vmem, size = 0x20000, scoped, tag = 'input window, operand 1']
    #allocation4 [shape = 's32[2]{0}', space=sflag, size = 0x8, scoped, tag = 'scoped memory for tpu_custom_call.1']
    #allocation5 [shape = 's32[2]{0}', space=sflag, size = 0x8, scoped, tag = 'scoped memory for tpu_custom_call.1']
    #allocation6 [shape = 'u8[131072]{0}', space=vmem, size = 0x20000, scoped, tag = 'input window, operand 2, single buffered']
    #allocation7 [shape = 's32[1]{0}', space=sflag, size = 0x4, scoped, tag = 'scoped memory for tpu_custom_call.1']
    #allocation8 [shape = 'u8[32768]{0}', space=vmem, size = 0x8000, scoped, tag = 'input window, operand 4, single buffered']
    #allocation9 [shape = 'u8[32768]{0}', space=vmem, size = 0x8000, scoped, tag = 'input window, operand 5, single buffered']
    #allocation10 [shape = 's32[1]{0}', space=sflag, size = 0x4, scoped, tag = 'scoped memory for tpu_custom_call.1']
    #allocation11 [shape = 'u8[32768]{0}', space=vmem, size = 0x8000, scoped, tag = 'input window, operand 7, single buffered']
    #allocation12 [shape = 'u8[131072]{0}', space=vmem, size = 0x20000, scoped, tag = 'output window, operand 0']
    #allocation13 [shape = 'u8[131072]{0}', space=vmem, size = 0x20000, scoped, tag = 'output window, operand 1']
    #allocation14 [shape = 's32[2]{0}', space=sflag, size = 0x8, scoped, tag = 'scoped memory for tpu_custom_call.1']
    %15 = vsyncpa [#allocation4], 0
    %s16 = scalar_lea.sflag [#allocation4], 1
    %17 = vsyncpa %s16, 0
    %18 = vsyncpa [#allocation7], 0
    %19 = vsyncpa [#allocation10], 0
    %20 = vsyncpa [#allocation5], 0
    %s21 = scalar_lea.sflag [#allocation5], 1
    %22 = vsyncpa %s21, 0
    %23 = vsyncpa [#allocation14], 0
    %s24 = scalar_lea.sflag [#allocation14], 1
    %25 = vsyncpa %s24, 0
    loop: start=0, step=1, limit=4
    $region2: #{tpu_custom_call.1} parent=1 // loop_pre_header
      _
    $region3: #{tpu_custom_call.1} parent=1 // loop_header
      %s27 = sphi 0, %s31
      %p28 = scmp.ge.s32.totalorder %s27, 4
      %s34 = sphi 0, %s46
      %s35 = sphi 0, %s42
      %s36 = sphi 0, %s34
      %s37 = sphi 0, %s35
      %s38 = sphi 0, %s36
      %s39 = sphi 0, %s37
      %s49 = sphi 0, %s51
      %s52 = sphi 0, %s49
      %s53 = sphi 0, %s52
      %s69 = sphi 0, %s53
      %s75 = sphi 0, %s77
      %s78 = sphi 0, %s75
      %s79 = sphi 0, %s78
      %s95 = sphi 0, %s79
      %s101 = sphi 0, %s103
      %s104 = sphi 0, %s101
      %s105 = sphi 0, %s104
      %s121 = sphi 0, %s105
      %s129 = sphi 0, %s131
      %s132 = sphi 0, %s129
      %s133 = sphi 0, %s132
      %s149 = sphi 0, %s133
      %s153 = sphi 0, %s153
      %s155 = sphi 0, %s153
      %s156 = sphi 0, %s155
      %s170 = sphi 0, %s156
      %s174 = sphi 0, %s174
      %s176 = sphi 0, %s174
      %s177 = sphi 0, %s176
      %s191 = sphi 0, %s177
      %s195 = sphi 0, %s195
      %s197 = sphi 0, %s195
      %s198 = sphi 0, %s197
      %s212 = sphi 0, %s198
      %s216 = sphi 0, %s216
      %s218 = sphi 0, %s216
      %s219 = sphi 0, %s218
      %s233 = sphi 0, %s219
      %s239 = sphi 0, %s241
      %s242 = sphi 0, %s239
      %s243 = sphi 0, %s242
      %s259 = sphi 0, %s243
      %s265 = sphi 0, %s267
      %s268 = sphi 0, %s265
      %s269 = sphi 0, %s268
      %s285 = sphi 0, %s269
    $region4: #{tpu_custom_call.1} parent=1 // loop_header_branch
      %30 = sbr.rel (%p28) target = $region8
    $region5: #{tpu_custom_call.1} parent=1 // loop_body
      %s32 = ssub.s32 %s27, 1
      %s33 = ssub.s32 %s27, 2
      %s40 = sadd.s32 1, %s35
      %p41 = scmp.ge.s32.totalorder %s40, 1
      %s42 = scalar_select %p41, 0, %s40
      %s43 = sadd.s32 1, %s34
      %s44 = scalar_select %p41, %s43, %s34
      %p45 = scmp.ge.s32.totalorder %s44, 2
      %s46 = scalar_select %p45, 0, %s44
      %s47 = ssub.s32 %s34, %s46
      %p48 = scmp.eq.s32.totalorder %s47, 0
      %s50 = sadd.s32 %s49, 1
      %s51 = scalar_select %p48, %s49, %s50
      %p54 = pneg %p48
      %p55 = scmp.eq.s32.totalorder %s27, 1
      %p56 = por %p54, %p55
      %p57 = scmp.ne.s32.totalorder %s49, %s52
      %p58 = scmp.eq.s32.totalorder %s27, 0
      %p59 = por %p57, %p58
      %p60 = scmp.ne.s32.totalorder %s49, %s52
      %p61 = scmp.eq.s32.totalorder %s32, 1
      %p62 = por %p60, %p61
      %p63 = scmp.ne.s32.totalorder %s52, %s53
      %p64 = scmp.eq.s32.totalorder %s32, 0
      %p65 = por %p63, %p64
      %p66 = scmp.ne.s32.totalorder %s52, %s53
      %p67 = scmp.eq.s32.totalorder %s33, 1
      %p68 = por %p66, %p67
      %p70 = scmp.ne.s32.totalorder %s53, %s69
      %p71 = scmp.eq.s32.totalorder %s33, 0
      %p72 = por %p70, %p71
      %s73 = ssub.s32 %s34, %s46
      %p74 = scmp.eq.s32.totalorder %s73, 0
      %s76 = sadd.s32 %s75, 1
      %s77 = scalar_select %p74, %s75, %s76
      %p80 = pneg %p74
      %p81 = scmp.eq.s32.totalorder %s27, 1
      %p82 = por %p80, %p81
      %p83 = scmp.ne.s32.totalorder %s75, %s78
      %p84 = scmp.eq.s32.totalorder %s27, 0
      %p85 = por %p83, %p84
      %p86 = scmp.ne.s32.totalorder %s75, %s78
      %p87 = scmp.eq.s32.totalorder %s32, 1
      %p88 = por %p86, %p87
      %p89 = scmp.ne.s32.totalorder %s78, %s79
      %p90 = scmp.eq.s32.totalorder %s32, 0
      %p91 = por %p89, %p90
      %p92 = scmp.ne.s32.totalorder %s78, %s79
      %p93 = scmp.eq.s32.totalorder %s33, 1
      %p94 = por %p92, %p93
      %p96 = scmp.ne.s32.totalorder %s79, %s95
      %p97 = scmp.eq.s32.totalorder %s33, 0
      %p98 = por %p96, %p97
      %s99 = ssub.s32 %s35, %s42
      %p100 = scmp.eq.s32.totalorder %s99, 0
      %s102 = sadd.s32 %s101, 1
      %s103 = scalar_select %p100, %s101, %s102
      %p106 = pneg %p100
      %p107 = scmp.eq.s32.totalorder %s27, 1
      %p108 = por %p106, %p107
      %p109 = scmp.ne.s32.totalorder %s101, %s104
      %p110 = scmp.eq.s32.totalorder %s27, 0
      %p111 = por %p109, %p110
      %p112 = scmp.ne.s32.totalorder %s101, %s104
      %p113 = scmp.eq.s32.totalorder %s32, 1
      %p114 = por %p112, %p113
      %p115 = scmp.ne.s32.totalorder %s104, %s105
      %p116 = scmp.eq.s32.totalorder %s32, 0
      %p117 = por %p115, %p116
      %p118 = scmp.ne.s32.totalorder %s104, %s105
      %p119 = scmp.eq.s32.totalorder %s33, 1
      %p120 = por %p118, %p119
      %p122 = scmp.ne.s32.totalorder %s105, %s121
      %p123 = scmp.eq.s32.totalorder %s33, 0
      %p124 = por %p122, %p123
      %s125 = ssub.s32 %s34, %s46
      %s126 = ssub.s32 %s35, %s42
      %s127 = sor.u32 %s125, %s126
      %p128 = scmp.eq.s32.totalorder %s127, 0
      %s130 = sadd.s32 %s129, 1
      %s131 = scalar_select %p128, %s129, %s130
      %p134 = pneg %p128
      %p135 = scmp.eq.s32.totalorder %s27, 1
      %p136 = por %p134, %p135
      %p137 = scmp.ne.s32.totalorder %s129, %s132
      %p138 = scmp.eq.s32.totalorder %s27, 0
      %p139 = por %p137, %p138
      %p140 = scmp.ne.s32.totalorder %s129, %s132
      %p141 = scmp.eq.s32.totalorder %s32, 1
      %p142 = por %p140, %p141
      %p143 = scmp.ne.s32.totalorder %s132, %s133
      %p144 = scmp.eq.s32.totalorder %s32, 0
      %p145 = por %p143, %p144
      %p146 = scmp.ne.s32.totalorder %s132, %s133
      %p147 = scmp.eq.s32.totalorder %s33, 1
      %p148 = por %p146, %p147
      %p150 = scmp.ne.s32.totalorder %s133, %s149
      %p151 = scmp.eq.s32.totalorder %s33, 0
      %p152 = por %p150, %p151
      %s154 = sadd.s32 %s153, 1
      %p157 = scmp.eq.s32.totalorder %s27, 1
      %p158 = scmp.ne.s32.totalorder %s153, %s155
      %p159 = scmp.eq.s32.totalorder %s27, 0
      %p160 = por %p158, %p159
      %p161 = scmp.ne.s32.totalorder %s153, %s155
      %p162 = scmp.eq.s32.totalorder %s32, 1
      %p163 = por %p161, %p162
      %p164 = scmp.ne.s32.totalorder %s155, %s156
      %p165 = scmp.eq.s32.totalorder %s32, 0
      %p166 = por %p164, %p165
      %p167 = scmp.ne.s32.totalorder %s155, %s156
      %p168 = scmp.eq.s32.totalorder %s33, 1
      %p169 = por %p167, %p168
      %p171 = scmp.ne.s32.totalorder %s156, %s170
      %p172 = scmp.eq.s32.totalorder %s33, 0
      %p173 = por %p171, %p172
      %s175 = sadd.s32 %s174, 1
      %p178 = scmp.eq.s32.totalorder %s27, 1
      %p179 = scmp.ne.s32.totalorder %s174, %s176
      %p180 = scmp.eq.s32.totalorder %s27, 0
      %p181 = por %p179, %p180
      %p182 = scmp.ne.s32.totalorder %s174, %s176
      %p183 = scmp.eq.s32.totalorder %s32, 1
      %p184 = por %p182, %p183
      %p185 = scmp.ne.s32.totalorder %s176, %s177
      %p186 = scmp.eq.s32.totalorder %s32, 0
      %p187 = por %p185, %p186
      %p188 = scmp.ne.s32.totalorder %s176, %s177
      %p189 = scmp.eq.s32.totalorder %s33, 1
      %p190 = por %p188, %p189
      %p192 = scmp.ne.s32.totalorder %s177, %s191
      %p193 = scmp.eq.s32.totalorder %s33, 0
      %p194 = por %p192, %p193
      %s196 = sadd.s32 %s195, 1
      %p199 = scmp.eq.s32.totalorder %s27, 1
      %p200 = scmp.ne.s32.totalorder %s195, %s197
      %p201 = scmp.eq.s32.totalorder %s27, 0
      %p202 = por %p200, %p201
      %p203 = scmp.ne.s32.totalorder %s195, %s197
      %p204 = scmp.eq.s32.totalorder %s32, 1
      %p205 = por %p203, %p204
      %p206 = scmp.ne.s32.totalorder %s197, %s198
      %p207 = scmp.eq.s32.totalorder %s32, 0
      %p208 = por %p206, %p207
      %p209 = scmp.ne.s32.totalorder %s197, %s198
      %p210 = scmp.eq.s32.totalorder %s33, 1
      %p211 = por %p209, %p210
      %p213 = scmp.ne.s32.totalorder %s198, %s212
      %p214 = scmp.eq.s32.totalorder %s33, 0
      %p215 = por %p213, %p214
      %s217 = sadd.s32 %s216, 1
      %p220 = scmp.eq.s32.totalorder %s27, 1
      %p221 = scmp.ne.s32.totalorder %s216, %s218
      %p222 = scmp.eq.s32.totalorder %s27, 0
      %p223 = por %p221, %p222
      %p224 = scmp.ne.s32.totalorder %s216, %s218
      %p225 = scmp.eq.s32.totalorder %s32, 1
      %p226 = por %p224, %p225
      %p227 = scmp.ne.s32.totalorder %s218, %s219
      %p228 = scmp.eq.s32.totalorder %s32, 0
      %p229 = por %p227, %p228
      %p230 = scmp.ne.s32.totalorder %s218, %s219
      %p231 = scmp.eq.s32.totalorder %s33, 1
      %p232 = por %p230, %p231
      %p234 = scmp.ne.s32.totalorder %s219, %s233
      %p235 = scmp.eq.s32.totalorder %s33, 0
      %p236 = por %p234, %p235
      %s237 = ssub.s32 %s34, %s46
      %p238 = scmp.eq.s32.totalorder %s237, 0
      %s240 = sadd.s32 %s239, 1
      %s241 = scalar_select %p238, %s239, %s240
      %p244 = pneg %p238
      %p245 = scmp.eq.s32.totalorder %s27, 1
      %p246 = por %p244, %p245
      %p247 = scmp.ne.s32.totalorder %s239, %s242
      %p248 = scmp.eq.s32.totalorder %s27, 0
      %p249 = por %p247, %p248
      %p250 = scmp.ne.s32.totalorder %s239, %s242
      %p251 = scmp.eq.s32.totalorder %s32, 1
      %p252 = por %p250, %p251
      %p253 = scmp.ne.s32.totalorder %s242, %s243
      %p254 = scmp.eq.s32.totalorder %s32, 0
      %p255 = por %p253, %p254
      %p256 = scmp.ne.s32.totalorder %s242, %s243
      %p257 = scmp.eq.s32.totalorder %s33, 1
      %p258 = por %p256, %p257
      %p260 = scmp.ne.s32.totalorder %s243, %s259
      %p261 = scmp.eq.s32.totalorder %s33, 0
      %p262 = por %p260, %p261
      %s263 = ssub.s32 %s34, %s46
      %p264 = scmp.eq.s32.totalorder %s263, 0
      %s266 = sadd.s32 %s265, 1
      %s267 = scalar_select %p264, %s265, %s266
      %p270 = pneg %p264
      %p271 = scmp.eq.s32.totalorder %s27, 1
      %p272 = por %p270, %p271
      %p273 = scmp.ne.s32.totalorder %s265, %s268
      %p274 = scmp.eq.s32.totalorder %s27, 0
      %p275 = por %p273, %p274
      %p276 = scmp.ne.s32.totalorder %s265, %s268
      %p277 = scmp.eq.s32.totalorder %s32, 1
      %p278 = por %p276, %p277
      %p279 = scmp.ne.s32.totalorder %s268, %s269
      %p280 = scmp.eq.s32.totalorder %s32, 0
      %p281 = por %p279, %p280
      %p282 = scmp.ne.s32.totalorder %s268, %s269
      %p283 = scmp.eq.s32.totalorder %s33, 1
      %p284 = por %p282, %p283
      %p286 = scmp.ne.s32.totalorder %s269, %s285
      %p287 = scmp.eq.s32.totalorder %s33, 0
      %p288 = por %p286, %p287
      %p289 = scmp.le.s32.totalorder 1, %s27
      %p290 = scmp.lt.s32.totalorder %s27, 3
      %p291 = pnand %p289, %p290
      %p292 = pneg %p291
      // Predicated region
      $region9: #{tpu_custom_call.1} parent=5 // pred_check
        _
      $region10: #{tpu_custom_call.1} parent=5 // pred_check_branch
        %294 = sbr.rel (%p291) target = $region12
      $region11: #{tpu_custom_call.1} parent=5 // pred_region
        %s295 = ssub.s32 %s27, 1
        // Predicated region
        $region13: #{tpu_custom_call.1} parent=11 // pred_check
          %p296 = pneg %p117
        $region14: #{tpu_custom_call.1} parent=11 // pred_check_branch
          %298 = sbr.rel (%p296) target = $region16
        $region15: #{tpu_custom_call.1} parent=11 // pred_region
          %s299 = smul.u32 64, %s37
          %s301 = ssub.s32 4096, 4096
          %302 = vsyncadd [#allocation7], %s301
          %s303 = smul.addr %s299, 64
          %s304 = scalar_lea.hbm %s2, %s303
          %s305 = sshll.u32 [#allocation6], 4
          %s306 = int_to_ptr.vmem [resolvable:$true] %s305
          %311 = dma.hbm_to_vmem [thread:$0]  %s304, 4096, %s306, [#allocation7], 64, 64, 4
        $region16: #{tpu_custom_call.1} parent=11 // pred_fallthru
          _
        // Predicated region
        $region17: #{tpu_custom_call.1} parent=11 // pred_check
          %p312 = pneg %p166
        $region18: #{tpu_custom_call.1} parent=11 // pred_check_branch
          %314 = sbr.rel (%p312) target = $region20
        $region19: #{tpu_custom_call.1} parent=11 // pred_region
          %s316 = ssub.s32 1024, 1024
          %317 = vsyncadd [#allocation7], %s316
          %s318 = sshll.u32 [#allocation8], 4
          %s319 = int_to_ptr.vmem [resolvable:$true] %s318
          %324 = dma.hbm_to_vmem [thread:$0]  %s4, 1024, %s319, [#allocation7], 64, 64, 4
        $region20: #{tpu_custom_call.1} parent=11 // pred_fallthru
          _
        // Predicated region
        $region21: #{tpu_custom_call.1} parent=11 // pred_check
          %p325 = pneg %p187
        $region22: #{tpu_custom_call.1} parent=11 // pred_check_branch
          %327 = sbr.rel (%p325) target = $region24
        $region23: #{tpu_custom_call.1} parent=11 // pred_region
          %s329 = ssub.s32 1024, 1024
          %330 = vsyncadd [#allocation10], %s329
          %s331 = sshll.u32 [#allocation9], 4
          %s332 = int_to_ptr.vmem [resolvable:$true] %s331
          %337 = dma.hbm_to_vmem [thread:$0]  %s5, 1024, %s332, [#allocation10], 64, 64, 4
        $region24: #{tpu_custom_call.1} parent=11 // pred_fallthru
          _
        // Predicated region
        $region25: #{tpu_custom_call.1} parent=11 // pred_check
          %p338 = pneg %p208
        $region26: #{tpu_custom_call.1} parent=11 // pred_check_branch
          %340 = sbr.rel (%p338) target = $region28
        $region27: #{tpu_custom_call.1} parent=11 // pred_region
          _
        $region28: #{tpu_custom_call.1} parent=11 // pred_fallthru
          _
        // Predicated region
        $region29: #{tpu_custom_call.1} parent=11 // pred_check
          %p341 = pneg %p229
        $region30: #{tpu_custom_call.1} parent=11 // pred_check_branch
          %343 = sbr.rel (%p341) target = $region32
        $region31: #{tpu_custom_call.1} parent=11 // pred_region
          %s345 = ssub.s32 1024, 1024
          %346 = vsyncadd [#allocation10], %s345
          %s347 = sshll.u32 [#allocation11], 4
          %s348 = int_to_ptr.vmem [resolvable:$true] %s347
          %353 = dma.hbm_to_vmem [thread:$0]  %s7, 1024, %s348, [#allocation10], 64, 64, 4
        $region32: #{tpu_custom_call.1} parent=11 // pred_fallthru
          _
      $region12: #{tpu_custom_call.1} parent=5 // pred_fallthru
        _
      %p354 = scmp.lt.s32.totalorder %s27, 2
      // Predicated region
      $region33: #{tpu_custom_call.1} parent=5 // pred_check
        %p355 = pneg %p354
      $region34: #{tpu_custom_call.1} parent=5 // pred_check_branch
        %357 = sbr.rel (%p355) target = $region36
      $region35: #{tpu_custom_call.1} parent=5 // pred_region
        // Predicated region
        $region37: #{tpu_custom_call.1} parent=35 // pred_check
          %p358 = pneg %p59
        $region38: #{tpu_custom_call.1} parent=35 // pred_check_branch
          %360 = sbr.rel (%p358) target = $region40
        $region39: #{tpu_custom_call.1} parent=35 // pred_region
          %s361 = smul.u32 32, %s34
          %p362 = scmp.lt.s32.totalorder %s361, 63
          %s363 = scalar_select %p362, %s361, 63
          %s364 = smul.addr %s363, 8
          %s365 = scalar_lea.vmem %s0, %s364
          %s366 = smul.u32 32, %s34
        $region40: #{tpu_custom_call.1} parent=35 // pred_fallthru
          _
        // Predicated region
        $region41: #{tpu_custom_call.1} parent=35 // pred_check
          %p367 = pneg %p85
        $region42: #{tpu_custom_call.1} parent=35 // pred_check_branch
          %369 = sbr.rel (%p367) target = $region44
        $region43: #{tpu_custom_call.1} parent=35 // pred_region
          %s370 = sand.u32 %s75, 1
          %s371 = scalar_lea.sflag [#allocation4], %s370
          %s372 = sand.u32 %s75, 1
          %s373 = smul.addr %s372, 128
          %s374 = scalar_lea.vmem [#allocation3], %s373
          %s375 = smul.u32 32, %s34
          %s377 = ssub.s32 2048, 2048
          %378 = vsyncadd %s371, %s377
          %s379 = smul.addr %s375, 64
          %s380 = scalar_lea.hbm %s1, %s379
          %s381 = sshll.u32 %s374, 4
          %s382 = int_to_ptr.vmem [resolvable:$true] %s381
          %387 = dma.hbm_to_vmem [thread:$0]  %s380, 2048, %s382, %s371, 64, 64, 4
        $region44: #{tpu_custom_call.1} parent=35 // pred_fallthru
          _
        // Predicated region
        $region45: #{tpu_custom_call.1} parent=35 // pred_check
          %p388 = pneg %p139
        $region46: #{tpu_custom_call.1} parent=35 // pred_check_branch
          %390 = sbr.rel (%p388) target = $region48
        $region47: #{tpu_custom_call.1} parent=35 // pred_region
          %s391 = smul.u32 8, %s34
          %s392 = smul.u32 4, %s35
          %p393 = scmp.lt.s32.totalorder %s391, 15
          %s394 = scalar_select %p393, %s391, 15
          %p395 = scmp.lt.s32.totalorder %s392, 3
          %s396 = scalar_select %p395, %s392, 3
          %s397 = smul.addr %s394, 4
          %s398 = sadd.s32 %s396, %s397
          %s399 = smul.addr %s398, 8
          %s400 = scalar_lea.vmem %s3, %s399
          %s401 = smul.u32 8, %s34
          %s402 = smul.u32 4, %s35
        $region48: #{tpu_custom_call.1} parent=35 // pred_fallthru
          _
      $region36: #{tpu_custom_call.1} parent=5 // pred_fallthru
        _
      %p403 = scmp.le.s32.totalorder 1, %s27
      %p404 = scmp.lt.s32.totalorder %s27, 3
      %p405 = pnand %p403, %p404
      %p406 = pneg %p405
      // Predicated region
      $region49: #{tpu_custom_call.1} parent=5 // pred_check
        _
      $region50: #{tpu_custom_call.1} parent=5 // pred_check_branch
        %408 = sbr.rel (%p405) target = $region52
      $region51: #{tpu_custom_call.1} parent=5 // pred_region
        %s409 = ssub.s32 %s27, 1
        %s410 = sand.u32 %s78, 1
        %s411 = scalar_lea.sflag [#allocation4], %s410
        %s412 = sand.u32 %s78, 1
        %s413 = smul.addr %s412, 128
        %s414 = scalar_lea.vmem [#allocation3], %s413
        // Predicated region
        $region53: #{tpu_custom_call.1} parent=51 // pred_check
          %p415 = pneg %p91
        $region54: #{tpu_custom_call.1} parent=51 // pred_check_branch
          %417 = sbr.rel (%p415) target = $region56
        $region55: #{tpu_custom_call.1} parent=51 // pred_region
          %418 = dma.done %s411, 2048
        $region56: #{tpu_custom_call.1} parent=51 // pred_fallthru
          _
        // Predicated region
        $region57: #{tpu_custom_call.1} parent=51 // pred_check
          %p419 = pneg %p117
        $region58: #{tpu_custom_call.1} parent=51 // pred_check_branch
          %421 = sbr.rel (%p419) target = $region60
        $region59: #{tpu_custom_call.1} parent=51 // pred_region
          %422 = dma.done [#allocation7], 4096
        $region60: #{tpu_custom_call.1} parent=51 // pred_fallthru
          _
        // Predicated region
        $region61: #{tpu_custom_call.1} parent=51 // pred_check
          %p423 = pneg %p166
        $region62: #{tpu_custom_call.1} parent=51 // pred_check_branch
          %425 = sbr.rel (%p423) target = $region64
        $region63: #{tpu_custom_call.1} parent=51 // pred_region
          %426 = dma.done [#allocation7], 1024
        $region64: #{tpu_custom_call.1} parent=51 // pred_fallthru
          _
        // Predicated region
        $region65: #{tpu_custom_call.1} parent=51 // pred_check
          %p427 = pneg %p187
        $region66: #{tpu_custom_call.1} parent=51 // pred_check_branch
          %429 = sbr.rel (%p427) target = $region68
        $region67: #{tpu_custom_call.1} parent=51 // pred_region
          %430 = dma.done [#allocation10], 1024
        $region68: #{tpu_custom_call.1} parent=51 // pred_fallthru
          _
        // Predicated region
        $region69: #{tpu_custom_call.1} parent=51 // pred_check
          %p431 = pneg %p229
        $region70: #{tpu_custom_call.1} parent=51 // pred_check_branch
          %433 = sbr.rel (%p431) target = $region72
        $region71: #{tpu_custom_call.1} parent=51 // pred_region
          %434 = dma.done [#allocation10], 1024
        $region72: #{tpu_custom_call.1} parent=51 // pred_fallthru
          _
        %s435 = smul.u32 32, %s36
        %p436 = scmp.lt.s32.totalorder %s435, 63
        %s437 = scalar_select %p436, %s435, 63
        %s438 = smul.addr %s437, 8
        %s439 = scalar_lea.vmem %s0, %s438
        %p440 = pneg %p65
        %p441 = pneg %p62
        %s442 = sand.u32 %s78, 1
        %s443 = scalar_lea.sflag [#allocation4], %s442
        %s444 = sand.u32 %s78, 1
        %s445 = smul.addr %s444, 128
        %s446 = scalar_lea.vmem [#allocation3], %s445
        %p447 = pneg %p91
        %p448 = pneg %p88
        %p449 = pneg %p117
        %p450 = pneg %p114
        %s451 = smul.u32 8, %s36
        %s452 = smul.u32 4, %s37
        %p453 = scmp.lt.s32.totalorder %s451, 15
        %s454 = scalar_select %p453, %s451, 15
        %p455 = scmp.lt.s32.totalorder %s452, 3
        %s456 = scalar_select %p455, %s452, 3
        %s457 = smul.addr %s454, 4
        %s458 = sadd.s32 %s456, %s457
        %s459 = smul.addr %s458, 8
        %s460 = scalar_lea.vmem %s3, %s459
        %p461 = pneg %p145
        %p462 = pneg %p142
        %p463 = pneg %p166
        %p464 = pneg %p163
        %p465 = pneg %p187
        %p466 = pneg %p184
        %p467 = pneg %p208
        %p468 = pneg %p205
        %p469 = pneg %p229
        %p470 = pneg %p226
        %p471 = pneg %p255
        %p472 = pneg %p252
        %s473 = sand.u32 %s242, 1
        %s474 = scalar_lea.sflag [#allocation5], %s473
        %s475 = sand.u32 %s242, 1
        %s476 = smul.addr %s475, 128
        %s477 = scalar_lea.vmem [#allocation12], %s476
        %p478 = pneg %p281
        %p479 = pneg %p278
        %s480 = sand.u32 %s268, 1
        %s481 = scalar_lea.sflag [#allocation14], %s480
        %s482 = sand.u32 %s268, 1
        %s483 = smul.addr %s482, 128
        %s484 = scalar_lea.vmem [#allocation13], %s483
        %s485 = smul.u32 32, %s36
        %p486 = scmp.lt.s32.totalorder %s485, 63
        %s487 = scalar_select %p486, %s485, 63
        %s488 = smul.addr %s487, 8
        %s489 = scalar_lea.vmem %s0, %s488
        %s490 = smul.u32 32, %s36
        %s491 = smul.u32 32, %s36
        %s492 = smul.u32 64, %s37
        %s493 = smul.u32 8, %s36
        %s494 = smul.u32 4, %s37
        %p495 = scmp.lt.s32.totalorder %s493, 15
        %s496 = scalar_select %p495, %s493, 15
        %p497 = scmp.lt.s32.totalorder %s494, 3
        %s498 = scalar_select %p497, %s494, 3
        %s499 = smul.addr %s496, 4
        %s500 = sadd.s32 %s498, %s499
        %s501 = smul.addr %s500, 8
        %s502 = scalar_lea.vmem %s3, %s501
        %s503 = smul.u32 8, %s36
        %s504 = smul.u32 4, %s37
        %s505 = smul.u32 32, %s36
        %s506 = smul.u32 32, %s36
        %p508 = scmp.eq.s32.totalorder %s37, 0
        // Predicated region
        $region73: #{tpu_custom_call.1} parent=51 // pred_check
          %p509 = pneg %p508
        $region74: #{tpu_custom_call.1} parent=51 // pred_check_branch
          %511 = sbr.rel (%p509) target = $region76
        $region75: #{tpu_custom_call.1} parent=51 // pred_region
          %512 = vst [vmem:[#allocation2] sm:$0xff] 0.0
          %513 = vst [vmem:[#allocation2 + $0x8] sm:$0xff] 0.0
          %514 = vst [vmem:[#allocation2 + $0x10] sm:$0xff] 0.0
          %515 = vst [vmem:[#allocation2 + $0x18] sm:$0xff] 0.0
          %516 = vst [vmem:[#allocation2 + $0x20] sm:$0xff] 0.0
          %517 = vst [vmem:[#allocation2 + $0x28] sm:$0xff] 0.0
          %518 = vst [vmem:[#allocation2 + $0x30] sm:$0xff] 0.0
          %519 = vst [vmem:[#allocation2 + $0x38] sm:$0xff] 0.0
          %520 = vst [vmem:[#allocation2 + $0x40] sm:$0xff] 0.0
          %521 = vst [vmem:[#allocation2 + $0x48] sm:$0xff] 0.0
          %522 = vst [vmem:[#allocation2 + $0x50] sm:$0xff] 0.0
          %523 = vst [vmem:[#allocation2 + $0x58] sm:$0xff] 0.0
          %524 = vst [vmem:[#allocation2 + $0x60] sm:$0xff] 0.0
          %525 = vst [vmem:[#allocation2 + $0x68] sm:$0xff] 0.0
          %526 = vst [vmem:[#allocation2 + $0x70] sm:$0xff] 0.0
          %527 = vst [vmem:[#allocation2 + $0x78] sm:$0xff] 0.0
          %528 = vst [vmem:[#allocation2 + $0x80] sm:$0xff] 0.0
          %529 = vst [vmem:[#allocation2 + $0x88] sm:$0xff] 0.0
          %530 = vst [vmem:[#allocation2 + $0x90] sm:$0xff] 0.0
          %531 = vst [vmem:[#allocation2 + $0x98] sm:$0xff] 0.0
          %532 = vst [vmem:[#allocation2 + $0xa0] sm:$0xff] 0.0
          %533 = vst [vmem:[#allocation2 + $0xa8] sm:$0xff] 0.0
          %534 = vst [vmem:[#allocation2 + $0xb0] sm:$0xff] 0.0
          %535 = vst [vmem:[#allocation2 + $0xb8] sm:$0xff] 0.0
          %536 = vst [vmem:[#allocation2 + $0xc0] sm:$0xff] 0.0
          %537 = vst [vmem:[#allocation2 + $0xc8] sm:$0xff] 0.0
          %538 = vst [vmem:[#allocation2 + $0xd0] sm:$0xff] 0.0
          %539 = vst [vmem:[#allocation2 + $0xd8] sm:$0xff] 0.0
          %540 = vst [vmem:[#allocation2 + $0xe0] sm:$0xff] 0.0
          %541 = vst [vmem:[#allocation2 + $0xe8] sm:$0xff] 0.0
          %542 = vst [vmem:[#allocation2 + $0xf0] sm:$0xff] 0.0
          %543 = vst [vmem:[#allocation2 + $0xf8] sm:$0xff] 0.0
        $region76: #{tpu_custom_call.1} parent=51 // pred_fallthru
          _
        %v544 = vld [vmem:[%s502] sm:$0xff]
        %v545 = vld [vmem:[%s502 + $0x8] sm:$0xff]
        %v546 = vld [vmem:[%s502 + $0x10] sm:$0xff]
        %v547 = vld [vmem:[%s502 + $0x18] sm:$0xff]
        %v548 = vld [vmem:[%s502 + $0x20] sm:$0xff]
        %v549 = vld [vmem:[%s502 + $0x28] sm:$0xff]
        %v550 = vld [vmem:[%s502 + $0x30] sm:$0xff]
        %v551 = vld [vmem:[%s502 + $0x38] sm:$0xff]
        %v552 = vld [vmem:[%s502 + $0x40] sm:$0xff]
        %v553 = vld [vmem:[%s502 + $0x48] sm:$0xff]
        %v554 = vld [vmem:[%s502 + $0x50] sm:$0xff]
        %v555 = vld [vmem:[%s502 + $0x58] sm:$0xff]
        %v556 = vld [vmem:[%s502 + $0x60] sm:$0xff]
        %v557 = vld [vmem:[%s502 + $0x68] sm:$0xff]
        %v558 = vld [vmem:[%s502 + $0x70] sm:$0xff]
        %v559 = vld [vmem:[%s502 + $0x78] sm:$0xff]
        %v560 = vld [vmem:[%s502 + $0x80] sm:$0xff]
        %v561 = vld [vmem:[%s502 + $0x88] sm:$0xff]
        %v562 = vld [vmem:[%s502 + $0x90] sm:$0xff]
        %v563 = vld [vmem:[%s502 + $0x98] sm:$0xff]
        %v564 = vld [vmem:[%s502 + $0xa0] sm:$0xff]
        %v565 = vld [vmem:[%s502 + $0xa8] sm:$0xff]
        %v566 = vld [vmem:[%s502 + $0xb0] sm:$0xff]
        %v567 = vld [vmem:[%s502 + $0xb8] sm:$0xff]
        %v568 = vld [vmem:[%s502 + $0xc0] sm:$0xff]
        %v569 = vld [vmem:[%s502 + $0xc8] sm:$0xff]
        %v570 = vld [vmem:[%s502 + $0xd0] sm:$0xff]
        %v571 = vld [vmem:[%s502 + $0xd8] sm:$0xff]
        %v572 = vld [vmem:[%s502 + $0xe0] sm:$0xff]
        %v573 = vld [vmem:[%s502 + $0xe8] sm:$0xff]
        %v574 = vld [vmem:[%s502 + $0xf0] sm:$0xff]
        %v575 = vld [vmem:[%s502 + $0xf8] sm:$0xff]
        %v576 = vunpack.c.l.s8.bf16 %v544
        %v577 = vunpack.c.l.s8.bf16 %v545
        %v578 = vunpack.c.l.s8.bf16 %v546
        %v579 = vunpack.c.l.s8.bf16 %v547
        %v580 = vunpack.c.h.s8.bf16 %v544
        %v581 = vunpack.c.h.s8.bf16 %v545
        %v582 = vunpack.c.h.s8.bf16 %v546
        %v583 = vunpack.c.h.s8.bf16 %v547
        %v584 = vunpack.c.l.s8.bf16 %v548
        %v585 = vunpack.c.l.s8.bf16 %v549
        %v586 = vunpack.c.l.s8.bf16 %v550
        %v587 = vunpack.c.l.s8.bf16 %v551
        %v588 = vunpack.c.h.s8.bf16 %v548
        %v589 = vunpack.c.h.s8.bf16 %v549
        %v590 = vunpack.c.h.s8.bf16 %v550
        %v591 = vunpack.c.h.s8.bf16 %v551
        %v592 = vunpack.c.l.s8.bf16 %v552
        %v593 = vunpack.c.l.s8.bf16 %v553
        %v594 = vunpack.c.l.s8.bf16 %v554
        %v595 = vunpack.c.l.s8.bf16 %v555
        %v596 = vunpack.c.h.s8.bf16 %v552
        %v597 = vunpack.c.h.s8.bf16 %v553
        %v598 = vunpack.c.h.s8.bf16 %v554
        %v599 = vunpack.c.h.s8.bf16 %v555
        %v600 = vunpack.c.l.s8.bf16 %v556
        %v601 = vunpack.c.l.s8.bf16 %v557
        %v602 = vunpack.c.l.s8.bf16 %v558
        %v603 = vunpack.c.l.s8.bf16 %v559
        %v604 = vunpack.c.h.s8.bf16 %v556
        %v605 = vunpack.c.h.s8.bf16 %v557
        %v606 = vunpack.c.h.s8.bf16 %v558
        %v607 = vunpack.c.h.s8.bf16 %v559
        %v608 = vunpack.c.l.s8.bf16 %v560
        %v609 = vunpack.c.l.s8.bf16 %v561
        %v610 = vunpack.c.l.s8.bf16 %v562
        %v611 = vunpack.c.l.s8.bf16 %v563
        %v612 = vunpack.c.h.s8.bf16 %v560
        %v613 = vunpack.c.h.s8.bf16 %v561
        %v614 = vunpack.c.h.s8.bf16 %v562
        %v615 = vunpack.c.h.s8.bf16 %v563
        %v616 = vunpack.c.l.s8.bf16 %v564
        %v617 = vunpack.c.l.s8.bf16 %v565
        %v618 = vunpack.c.l.s8.bf16 %v566
        %v619 = vunpack.c.l.s8.bf16 %v567
        %v620 = vunpack.c.h.s8.bf16 %v564
        %v621 = vunpack.c.h.s8.bf16 %v565
        %v622 = vunpack.c.h.s8.bf16 %v566
        %v623 = vunpack.c.h.s8.bf16 %v567
        %v624 = vunpack.c.l.s8.bf16 %v568
        %v625 = vunpack.c.l.s8.bf16 %v569
        %v626 = vunpack.c.l.s8.bf16 %v570
        %v627 = vunpack.c.l.s8.bf16 %v571
        %v628 = vunpack.c.h.s8.bf16 %v568
        %v629 = vunpack.c.h.s8.bf16 %v569
        %v630 = vunpack.c.h.s8.bf16 %v570
        %v631 = vunpack.c.h.s8.bf16 %v571
        %v632 = vunpack.c.l.s8.bf16 %v572
        %v633 = vunpack.c.l.s8.bf16 %v573
        %v634 = vunpack.c.l.s8.bf16 %v574
        %v635 = vunpack.c.l.s8.bf16 %v575
        %v636 = vunpack.c.h.s8.bf16 %v572
        %v637 = vunpack.c.h.s8.bf16 %v573
        %v638 = vunpack.c.h.s8.bf16 %v574
        %v639 = vunpack.c.h.s8.bf16 %v575
        %v640 = vld [vmem:[#allocation2] sm:$0xff]
        %v641 = vld [vmem:[#allocation2 + $0x8] sm:$0xff]
        %v642 = vld [vmem:[#allocation2 + $0x10] sm:$0xff]
        %v643 = vld [vmem:[#allocation2 + $0x18] sm:$0xff]
        %v644 = vld [vmem:[#allocation2 + $0x20] sm:$0xff]
        %v645 = vld [vmem:[#allocation2 + $0x28] sm:$0xff]
        %v646 = vld [vmem:[#allocation2 + $0x30] sm:$0xff]
        %v647 = vld [vmem:[#allocation2 + $0x38] sm:$0xff]
        %v648 = vld [vmem:[#allocation2 + $0x40] sm:$0xff]
        %v649 = vld [vmem:[#allocation2 + $0x48] sm:$0xff]
        %v650 = vld [vmem:[#allocation2 + $0x50] sm:$0xff]
        %v651 = vld [vmem:[#allocation2 + $0x58] sm:$0xff]
        %v652 = vld [vmem:[#allocation2 + $0x60] sm:$0xff]
        %v653 = vld [vmem:[#allocation2 + $0x68] sm:$0xff]
        %v654 = vld [vmem:[#allocation2 + $0x70] sm:$0xff]
        %v655 = vld [vmem:[#allocation2 + $0x78] sm:$0xff]
        %v656 = vld [vmem:[#allocation2 + $0x80] sm:$0xff]
        %v657 = vld [vmem:[#allocation2 + $0x88] sm:$0xff]
        %v658 = vld [vmem:[#allocation2 + $0x90] sm:$0xff]
        %v659 = vld [vmem:[#allocation2 + $0x98] sm:$0xff]
        %v660 = vld [vmem:[#allocation2 + $0xa0] sm:$0xff]
        %v661 = vld [vmem:[#allocation2 + $0xa8] sm:$0xff]
        %v662 = vld [vmem:[#allocation2 + $0xb0] sm:$0xff]
        %v663 = vld [vmem:[#allocation2 + $0xb8] sm:$0xff]
        %v664 = vld [vmem:[#allocation2 + $0xc0] sm:$0xff]
        %v665 = vld [vmem:[#allocation2 + $0xc8] sm:$0xff]
        %v666 = vld [vmem:[#allocation2 + $0xd0] sm:$0xff]
        %v667 = vld [vmem:[#allocation2 + $0xd8] sm:$0xff]
        %v668 = vld [vmem:[#allocation2 + $0xe0] sm:$0xff]
        %v669 = vld [vmem:[#allocation2 + $0xe8] sm:$0xff]
        %v670 = vld [vmem:[#allocation2 + $0xf0] sm:$0xff]
        %v671 = vld [vmem:[#allocation2 + $0xf8] sm:$0xff]
        %v672 = vld [vmem:[#allocation6] sm:$0xf]
        %v673 = vld [vmem:[#allocation6 + $0x4] sm:$0xf]
        %v674 = vld [vmem:[#allocation6 + $0x8] sm:$0xf]
        %v675 = vld [vmem:[#allocation6 + $0xc] sm:$0xf]
        %v676 = vld [vmem:[#allocation6 + $0x10] sm:$0xf]
        %v677 = vld [vmem:[#allocation6 + $0x14] sm:$0xf]
        %v678 = vld [vmem:[#allocation6 + $0x18] sm:$0xf]
        %v679 = vld [vmem:[#allocation6 + $0x1c] sm:$0xf]
        %v680 = vld [vmem:[#allocation6 + $0x20] sm:$0xf]
        %v681 = vld [vmem:[#allocation6 + $0x24] sm:$0xf]
        %v682 = vld [vmem:[#allocation6 + $0x28] sm:$0xf]
        %v683 = vld [vmem:[#allocation6 + $0x2c] sm:$0xf]
        %v684 = vld [vmem:[#allocation6 + $0x30] sm:$0xf]
        %v685 = vld [vmem:[#allocation6 + $0x34] sm:$0xf]
        %v686 = vld [vmem:[#allocation6 + $0x38] sm:$0xf]
        %v687 = vld [vmem:[#allocation6 + $0x3c] sm:$0xf]
        %v688 = vld [vmem:[#allocation6 + $0x40] sm:$0xf]
        %v689 = vld [vmem:[#allocation6 + $0x44] sm:$0xf]
        %v690 = vld [vmem:[#allocation6 + $0x48] sm:$0xf]
        %v691 = vld [vmem:[#allocation6 + $0x4c] sm:$0xf]
        %v692 = vld [vmem:[#allocation6 + $0x50] sm:$0xf]
        %v693 = vld [vmem:[#allocation6 + $0x54] sm:$0xf]
        %v694 = vld [vmem:[#allocation6 + $0x58] sm:$0xf]
        %v695 = vld [vmem:[#allocation6 + $0x5c] sm:$0xf]
        %v696 = vld [vmem:[#allocation6 + $0x60] sm:$0xf]
        %v697 = vld [vmem:[#allocation6 + $0x64] sm:$0xf]
        %v698 = vld [vmem:[#allocation6 + $0x68] sm:$0xf]
        %v699 = vld [vmem:[#allocation6 + $0x6c] sm:$0xf]
        %v700 = vld [vmem:[#allocation6 + $0x70] sm:$0xf]
        %v701 = vld [vmem:[#allocation6 + $0x74] sm:$0xf]
        %v702 = vld [vmem:[#allocation6 + $0x78] sm:$0xf]
        %v703 = vld [vmem:[#allocation6 + $0x7c] sm:$0xf]
        %v704 = vld [vmem:[#allocation6 + $0x80] sm:$0xf]
        %v705 = vld [vmem:[#allocation6 + $0x84] sm:$0xf]
        %v706 = vld [vmem:[#allocation6 + $0x88] sm:$0xf]
        %v707 = vld [vmem:[#allocation6 + $0x8c] sm:$0xf]
        %v708 = vld [vmem:[#allocation6 + $0x90] sm:$0xf]
        %v709 = vld [vmem:[#allocation6 + $0x94] sm:$0xf]
        %v710 = vld [vmem:[#allocation6 + $0x98] sm:$0xf]
        %v711 = vld [vmem:[#allocation6 + $0x9c] sm:$0xf]
        %v712 = vld [vmem:[#allocation6 + $0xa0] sm:$0xf]
        %v713 = vld [vmem:[#allocation6 + $0xa4] sm:$0xf]
        %v714 = vld [vmem:[#allocation6 + $0xa8] sm:$0xf]
        %v715 = vld [vmem:[#allocation6 + $0xac] sm:$0xf]
        %v716 = vld [vmem:[#allocation6 + $0xb0] sm:$0xf]
        %v717 = vld [vmem:[#allocation6 + $0xb4] sm:$0xf]
        %v718 = vld [vmem:[#allocation6 + $0xb8] sm:$0xf]
        %v719 = vld [vmem:[#allocation6 + $0xbc] sm:$0xf]
        %v720 = vld [vmem:[#allocation6 + $0xc0] sm:$0xf]
        %v721 = vld [vmem:[#allocation6 + $0xc4] sm:$0xf]
        %v722 = vld [vmem:[#allocation6 + $0xc8] sm:$0xf]
        %v723 = vld [vmem:[#allocation6 + $0xcc] sm:$0xf]
        %v724 = vld [vmem:[#allocation6 + $0xd0] sm:$0xf]
        %v725 = vld [vmem:[#allocation6 + $0xd4] sm:$0xf]
        %v726 = vld [vmem:[#allocation6 + $0xd8] sm:$0xf]
        %v727 = vld [vmem:[#allocation6 + $0xdc] sm:$0xf]
        %v728 = vld [vmem:[#allocation6 + $0xe0] sm:$0xf]
        %v729 = vld [vmem:[#allocation6 + $0xe4] sm:$0xf]
        %v730 = vld [vmem:[#allocation6 + $0xe8] sm:$0xf]
        %v731 = vld [vmem:[#allocation6 + $0xec] sm:$0xf]
        %v732 = vld [vmem:[#allocation6 + $0xf0] sm:$0xf]
        %v733 = vld [vmem:[#allocation6 + $0xf4] sm:$0xf]
        %v734 = vld [vmem:[#allocation6 + $0xf8] sm:$0xf]
        %v735 = vld [vmem:[#allocation6 + $0xfc] sm:$0xf]
        %v800 = vunpack.c.l.b16 %v672
        %v801 = vunpack.c.l.b16 %v673
        %v802 = vunpack.c.l.b16 %v674
        %v803 = vunpack.c.l.b16 %v675
        %v804 = vunpack.c.l.b16 %v676
        %v805 = vunpack.c.l.b16 %v677
        %v806 = vunpack.c.l.b16 %v678
        %v807 = vunpack.c.l.b16 %v679
        %v808 = vunpack.c.l.b16 %v680
        %v809 = vunpack.c.l.b16 %v681
        %v810 = vunpack.c.l.b16 %v682
        %v811 = vunpack.c.l.b16 %v683
        %v812 = vunpack.c.l.b16 %v684
        %v813 = vunpack.c.l.b16 %v685
        %v814 = vunpack.c.l.b16 %v686
        %v815 = vunpack.c.l.b16 %v687
        %v816 = vunpack.c.l.b16 %v688
        %v817 = vunpack.c.l.b16 %v689
        %v818 = vunpack.c.l.b16 %v690
        %v819 = vunpack.c.l.b16 %v691
        %v820 = vunpack.c.l.b16 %v692
        %v821 = vunpack.c.l.b16 %v693
        %v822 = vunpack.c.l.b16 %v694
        %v823 = vunpack.c.l.b16 %v695
        %v824 = vunpack.c.l.b16 %v696
        %v825 = vunpack.c.l.b16 %v697
        %v826 = vunpack.c.l.b16 %v698
        %v827 = vunpack.c.l.b16 %v699
        %v828 = vunpack.c.l.b16 %v700
        %v829 = vunpack.c.l.b16 %v701
        %v830 = vunpack.c.l.b16 %v702
        %v831 = vunpack.c.l.b16 %v703
        %v832 = vunpack.c.l.b16 %v704
        %v833 = vunpack.c.l.b16 %v705
        %v834 = vunpack.c.l.b16 %v706
        %v835 = vunpack.c.l.b16 %v707
        %v836 = vunpack.c.l.b16 %v708
        %v837 = vunpack.c.l.b16 %v709
        %v838 = vunpack.c.l.b16 %v710
        %v839 = vunpack.c.l.b16 %v711
        %v840 = vunpack.c.l.b16 %v712
        %v841 = vunpack.c.l.b16 %v713
        %v842 = vunpack.c.l.b16 %v714
        %v843 = vunpack.c.l.b16 %v715
        %v844 = vunpack.c.l.b16 %v716
        %v845 = vunpack.c.l.b16 %v717
        %v846 = vunpack.c.l.b16 %v718
        %v847 = vunpack.c.l.b16 %v719
        %v848 = vunpack.c.l.b16 %v720
        %v849 = vunpack.c.l.b16 %v721
        %v850 = vunpack.c.l.b16 %v722
        %v851 = vunpack.c.l.b16 %v723
        %v852 = vunpack.c.l.b16 %v724
        %v853 = vunpack.c.l.b16 %v725
        %v854 = vunpack.c.l.b16 %v726
        %v855 = vunpack.c.l.b16 %v727
        %v856 = vunpack.c.l.b16 %v728
        %v857 = vunpack.c.l.b16 %v729
        %v858 = vunpack.c.l.b16 %v730
        %v859 = vunpack.c.l.b16 %v731
        %v860 = vunpack.c.l.b16 %v732
        %v861 = vunpack.c.l.b16 %v733
        %v862 = vunpack.c.l.b16 %v734
        %v863 = vunpack.c.l.b16 %v735
        %v864 = vpack.c.b16 %v801, %v800
        %v865 = vpack.c.b16 %v803, %v802
        %v866 = vpack.c.b16 %v805, %v804
        %v867 = vpack.c.b16 %v807, %v806
        %v868 = vpack.c.b16 %v809, %v808
        %v869 = vpack.c.b16 %v811, %v810
        %v870 = vpack.c.b16 %v813, %v812
        %v871 = vpack.c.b16 %v815, %v814
        %v872 = vpack.c.b16 %v817, %v816
        %v873 = vpack.c.b16 %v819, %v818
        %v874 = vpack.c.b16 %v821, %v820
        %v875 = vpack.c.b16 %v823, %v822
        %v876 = vpack.c.b16 %v825, %v824
        %v877 = vpack.c.b16 %v827, %v826
        %v878 = vpack.c.b16 %v829, %v828
        %v879 = vpack.c.b16 %v831, %v830
        %v880 = vpack.c.b16 %v833, %v832
        %v881 = vpack.c.b16 %v835, %v834
        %v882 = vpack.c.b16 %v837, %v836
        %v883 = vpack.c.b16 %v839, %v838
        %v884 = vpack.c.b16 %v841, %v840
        %v885 = vpack.c.b16 %v843, %v842
        %v886 = vpack.c.b16 %v845, %v844
        %v887 = vpack.c.b16 %v847, %v846
        %v888 = vpack.c.b16 %v849, %v848
        %v889 = vpack.c.b16 %v851, %v850
        %v890 = vpack.c.b16 %v853, %v852
        %v891 = vpack.c.b16 %v855, %v854
        %v892 = vpack.c.b16 %v857, %v856
        %v893 = vpack.c.b16 %v859, %v858
        %v894 = vpack.c.b16 %v861, %v860
        %v895 = vpack.c.b16 %v863, %v862
        %928 = vmatprep.subr.bf16.mxu0 0
        %929 = vmatpush1.bf16.msra.mxu0 %v864
        %930 = vmatprep.subr.bf16.mxu0 0
        %931 = vmatpush1.bf16.msra.mxu0 %v865
        %932 = vmatprep.subr.bf16.mxu0 0
        %933 = vmatpush1.bf16.msra.mxu0 %v866
        %934 = vmatprep.subr.bf16.mxu0 0
        %935 = vmatpush1.bf16.msra.mxu0 %v867
        %936 = vmatprep.subr.bf16.mxu0 0
        %937 = vmatpush1.bf16.msra.mxu0 %v868
        %938 = vmatprep.subr.bf16.mxu0 0
        %939 = vmatpush1.bf16.msra.mxu0 %v869
        %940 = vmatprep.subr.bf16.mxu0 0
        %941 = vmatpush1.bf16.msra.mxu0 %v870
        %942 = vmatprep.subr.bf16.mxu0 0
        %943 = vmatpush1.bf16.msra.mxu0 %v871
        %944 = vmatprep.subr.bf16.mxu0 0
        %945 = vmatpush1.bf16.msra.mxu0 %v872
        %946 = vmatprep.subr.bf16.mxu0 0
        %947 = vmatpush1.bf16.msra.mxu0 %v873
        %948 = vmatprep.subr.bf16.mxu0 0
        %949 = vmatpush1.bf16.msra.mxu0 %v874
        %950 = vmatprep.subr.bf16.mxu0 0
        %951 = vmatpush1.bf16.msra.mxu0 %v875
        %952 = vmatprep.subr.bf16.mxu0 0
        %953 = vmatpush1.bf16.msra.mxu0 %v876
        %954 = vmatprep.subr.bf16.mxu0 0
        %955 = vmatpush1.bf16.msra.mxu0 %v877
        %956 = vmatprep.subr.bf16.mxu0 0
        %957 = vmatpush1.bf16.msra.mxu0 %v878
        %958 = vmatprep.subr.bf16.mxu0 0
        %959 = vmatpush1.bf16.msra.mxu0 %v879
        %960 = vmatprep.mubr.bf16.mxu0 %v577
        %961 = vmatmul.mubr.bf16.gmra.mrb[0].mxu0 %v576
        %v962 = vpop.f32.mrb[0].mxu0
        %v963 = vadd.f32 0.0, %v962
        %v964 = vpop.f32.mrb[0].mxu0
        %v965 = vpop.f32.mrb[0].mxu0
        %v966 = vadd.f32 0.0, %v965
        %v967 = vpop.f32.mrb[0].mxu0
        %968 = vmatprep.mubr.bf16.mxu0 %v581
        %969 = vmatmul.mubr.bf16.gmra.mrb[0].mxu0 %v580
        %v970 = vpop.f32.mrb[0].mxu0
        %v971 = vadd.f32 0.0, %v970
        %v972 = vpop.f32.mrb[0].mxu0
        %v973 = vpop.f32.mrb[0].mxu0
        %v974 = vadd.f32 0.0, %v973
        %v975 = vpop.f32.mrb[0].mxu0
        %976 = vmatprep.mubr.bf16.mxu0 %v585
        %977 = vmatmul.mubr.bf16.gmra.mrb[0].mxu0 %v584
        %v978 = vpop.f32.mrb[0].mxu0
        %v979 = vadd.f32 0.0, %v978
        %v980 = vpop.f32.mrb[0].mxu0
        %v981 = vpop.f32.mrb[0].mxu0
        %v982 = vadd.f32 0.0, %v981
        %v983 = vpop.f32.mrb[0].mxu0
        %984 = vmatprep.mubr.bf16.mxu0 %v589
        %985 = vmatmul.mubr.bf16.gmra.mrb[0].mxu0 %v588
        %v986 = vpop.f32.mrb[0].mxu0
        %v987 = vadd.f32 0.0, %v986
        %v988 = vpop.f32.mrb[0].mxu0
        %v989 = vpop.f32.mrb[0].mxu0
        %v990 = vadd.f32 0.0, %v989
        %v991 = vpop.f32.mrb[0].mxu0
        %992 = vmatprep.mubr.bf16.mxu0 %v593
        %993 = vmatmul.mubr.bf16.gmra.mrb[0].mxu0 %v592
        %v994 = vpop.f32.mrb[0].mxu0
        %v995 = vadd.f32 0.0, %v994
        %v996 = vpop.f32.mrb[0].mxu0
        %v997 = vpop.f32.mrb[0].mxu0
        %v998 = vadd.f32 0.0, %v997
        %v999 = vpop.f32.mrb[0].mxu0
        %1000 = vmatprep.mubr.bf16.mxu0 %v597
        %1001 = vmatmul.mubr.bf16.gmra.mrb[0].mxu0 %v596
        %v1002 = vpop.f32.mrb[0].mxu0
        %v1003 = vadd.f32 0.0, %v1002
        %v1004 = vpop.f32.mrb[0].mxu0
        %v1005 = vpop.f32.mrb[0].mxu0
        %v1006 = vadd.f32 0.0, %v1005
        %v1007 = vpop.f32.mrb[0].mxu0
        %1008 = vmatprep.mubr.bf16.mxu0 %v601
        %1009 = vmatmul.mubr.bf16.gmra.mrb[0].mxu0 %v600
        %v1010 = vpop.f32.mrb[0].mxu0
        %v1011 = vadd.f32 0.0, %v1010
        %v1012 = vpop.f32.mrb[0].mxu0
        %v1013 = vpop.f32.mrb[0].mxu0
        %v1014 = vadd.f32 0.0, %v1013
        %v1015 = vpop.f32.mrb[0].mxu0
        %1016 = vmatprep.mubr.bf16.mxu0 %v605
        %1017 = vmatmul.mubr.bf16.gmra.mrb[0].mxu0 %v604
        %v1018 = vpop.f32.mrb[0].mxu0
        %v1019 = vadd.f32 0.0, %v1018
        %v1020 = vpop.f32.mrb[0].mxu0
        %v1021 = vpop.f32.mrb[0].mxu0
        %v1022 = vadd.f32 0.0, %v1021
        %v1023 = vpop.f32.mrb[0].mxu0
        %1024 = vmatprep.mubr.bf16.mxu0 %v609
        %1025 = vmatmul.mubr.bf16.gmra.mrb[0].mxu0 %v608
        %v1026 = vpop.f32.mrb[0].mxu0
        %v1027 = vadd.f32 0.0, %v1026
        %v1028 = vpop.f32.mrb[0].mxu0
        %v1029 = vpop.f32.mrb[0].mxu0
        %v1030 = vadd.f32 0.0, %v1029
        %v1031 = vpop.f32.mrb[0].mxu0
        %1032 = vmatprep.mubr.bf16.mxu0 %v613
        %1033 = vmatmul.mubr.bf16.gmra.mrb[0].mxu0 %v612
        %v1034 = vpop.f32.mrb[0].mxu0
        %v1035 = vadd.f32 0.0, %v1034
        %v1036 = vpop.f32.mrb[0].mxu0
        %v1037 = vpop.f32.mrb[0].mxu0
        %v1038 = vadd.f32 0.0, %v1037
        %v1039 = vpop.f32.mrb[0].mxu0
        %1040 = vmatprep.mubr.bf16.mxu0 %v617
        %1041 = vmatmul.mubr.bf16.gmra.mrb[0].mxu0 %v616
        %v1042 = vpop.f32.mrb[0].mxu0
        %v1043 = vadd.f32 0.0, %v1042
        %v1044 = vpop.f32.mrb[0].mxu0
        %v1045 = vpop.f32.mrb[0].mxu0
        %v1046 = vadd.f32 0.0, %v1045
        %v1047 = vpop.f32.mrb[0].mxu0
        %1048 = vmatprep.mubr.bf16.mxu0 %v621
        %1049 = vmatmul.mubr.bf16.gmra.mrb[0].mxu0 %v620
        %v1050 = vpop.f32.mrb[0].mxu0
        %v1051 = vadd.f32 0.0, %v1050
        %v1052 = vpop.f32.mrb[0].mxu0
        %v1053 = vpop.f32.mrb[0].mxu0
        %v1054 = vadd.f32 0.0, %v1053
        %v1055 = vpop.f32.mrb[0].mxu0
        %1056 = vmatprep.mubr.bf16.mxu0 %v625
        %1057 = vmatmul.mubr.bf16.gmra.mrb[0].mxu0 %v624
        %v1058 = vpop.f32.mrb[0].mxu0
        %v1059 = vadd.f32 0.0, %v1058
        %v1060 = vpop.f32.mrb[0].mxu0
        %v1061 = vpop.f32.mrb[0].mxu0
        %v1062 = vadd.f32 0.0, %v1061
        %v1063 = vpop.f32.mrb[0].mxu0
        %1064 = vmatprep.mubr.bf16.mxu0 %v629
        %1065 = vmatmul.mubr.bf16.gmra.mrb[0].mxu0 %v628
        %v1066 = vpop.f32.mrb[0].mxu0
        %v1067 = vadd.f32 0.0, %v1066
        %v1068 = vpop.f32.mrb[0].mxu0
        %v1069 = vpop.f32.mrb[0].mxu0
        %v1070 = vadd.f32 0.0, %v1069
        %v1071 = vpop.f32.mrb[0].mxu0
        %1072 = vmatprep.mubr.bf16.mxu0 %v633
        %1073 = vmatmul.mubr.bf16.gmra.mrb[0].mxu0 %v632
        %v1074 = vpop.f32.mrb[0].mxu0
        %v1075 = vadd.f32 0.0, %v1074
        %v1076 = vpop.f32.mrb[0].mxu0
        %v1077 = vpop.f32.mrb[0].mxu0
        %v1078 = vadd.f32 0.0, %v1077
        %v1079 = vpop.f32.mrb[0].mxu0
        %1080 = vmatprep.mubr.bf16.mxu0 %v637
        %1081 = vmatmul.mubr.bf16.gmra.mrb[0].mxu0 %v636
        %v1082 = vpop.f32.mrb[0].mxu0
        %v1083 = vadd.f32 0.0, %v1082
        %v1084 = vpop.f32.mrb[0].mxu0
        %v1085 = vpop.f32.mrb[0].mxu0
        %v1086 = vadd.f32 0.0, %v1085
        %v1087 = vpop.f32.mrb[0].mxu0
        %1088 = vdwg.mxu0
        %1089 = vmatprep.subr.bf16.mxu0 0
        %1090 = vmatpush1.bf16.msra.mxu0 %v880
        %1091 = vmatprep.subr.bf16.mxu0 0
        %1092 = vmatpush1.bf16.msra.mxu0 %v881
        %1093 = vmatprep.subr.bf16.mxu0 0
        %1094 = vmatpush1.bf16.msra.mxu0 %v882
        %1095 = vmatprep.subr.bf16.mxu0 0
        %1096 = vmatpush1.bf16.msra.mxu0 %v883
        %1097 = vmatprep.subr.bf16.mxu0 0
        %1098 = vmatpush1.bf16.msra.mxu0 %v884
        %1099 = vmatprep.subr.bf16.mxu0 0
        %1100 = vmatpush1.bf16.msra.mxu0 %v885
        %1101 = vmatprep.subr.bf16.mxu0 0
        %1102 = vmatpush1.bf16.msra.mxu0 %v886
        %1103 = vmatprep.subr.bf16.mxu0 0
        %1104 = vmatpush1.bf16.msra.mxu0 %v887
        %1105 = vmatprep.subr.bf16.mxu0 0
        %1106 = vmatpush1.bf16.msra.mxu0 %v888
        %1107 = vmatprep.subr.bf16.mxu0 0
        %1108 = vmatpush1.bf16.msra.mxu0 %v889
        %1109 = vmatprep.subr.bf16.mxu0 0
        %1110 = vmatpush1.bf16.msra.mxu0 %v890
        %1111 = vmatprep.subr.bf16.mxu0 0
        %1112 = vmatpush1.bf16.msra.mxu0 %v891
        %1113 = vmatprep.subr.bf16.mxu0 0
        %1114 = vmatpush1.bf16.msra.mxu0 %v892
        %1115 = vmatprep.subr.bf16.mxu0 0
        %1116 = vmatpush1.bf16.msra.mxu0 %v893
        %1117 = vmatprep.subr.bf16.mxu0 0
        %1118 = vmatpush1.bf16.msra.mxu0 %v894
        %1119 = vmatprep.subr.bf16.mxu0 0
        %1120 = vmatpush1.bf16.msra.mxu0 %v895
        %1121 = vmatprep.mubr.bf16.mxu0 %v579
        %1122 = vmatmul.mubr.bf16.gmra.mrb[0].mxu0 %v578
        %v1123 = vpop.f32.mrb[0].mxu0
        %v1124 = vadd.f32 %v963, %v1123
        %v1125 = vpop.f32.mrb[0].mxu0
        %v1126 = vpop.f32.mrb[0].mxu0
        %v1127 = vadd.f32 %v966, %v1126
        %v1128 = vpop.f32.mrb[0].mxu0
        %1129 = vmatprep.mubr.bf16.mxu0 %v583
        %1130 = vmatmul.mubr.bf16.gmra.mrb[0].mxu0 %v582
        %v1131 = vpop.f32.mrb[0].mxu0
        %v1132 = vadd.f32 %v971, %v1131
        %v1133 = vpop.f32.mrb[0].mxu0
        %v1134 = vpop.f32.mrb[0].mxu0
        %v1135 = vadd.f32 %v974, %v1134
        %v1136 = vpop.f32.mrb[0].mxu0
        %1137 = vmatprep.mubr.bf16.mxu0 %v587
        %1138 = vmatmul.mubr.bf16.gmra.mrb[0].mxu0 %v586
        %v1139 = vpop.f32.mrb[0].mxu0
        %v1140 = vadd.f32 %v979, %v1139
        %v1141 = vpop.f32.mrb[0].mxu0
        %v1142 = vpop.f32.mrb[0].mxu0
        %v1143 = vadd.f32 %v982, %v1142
        %v1144 = vpop.f32.mrb[0].mxu0
        %1145 = vmatprep.mubr.bf16.mxu0 %v591
        %1146 = vmatmul.mubr.bf16.gmra.mrb[0].mxu0 %v590
        %v1147 = vpop.f32.mrb[0].mxu0
        %v1148 = vadd.f32 %v987, %v1147
        %v1149 = vpop.f32.mrb[0].mxu0
        %v1150 = vpop.f32.mrb[0].mxu0
        %v1151 = vadd.f32 %v990, %v1150
        %v1152 = vpop.f32.mrb[0].mxu0
        %1153 = vmatprep.mubr.bf16.mxu0 %v595
        %1154 = vmatmul.mubr.bf16.gmra.mrb[0].mxu0 %v594
        %v1155 = vpop.f32.mrb[0].mxu0
        %v1156 = vadd.f32 %v995, %v1155
        %v1157 = vpop.f32.mrb[0].mxu0
        %v1158 = vpop.f32.mrb[0].mxu0
        %v1159 = vadd.f32 %v998, %v1158
        %v1160 = vpop.f32.mrb[0].mxu0
        %1161 = vmatprep.mubr.bf16.mxu0 %v599
        %1162 = vmatmul.mubr.bf16.gmra.mrb[0].mxu0 %v598
        %v1163 = vpop.f32.mrb[0].mxu0
        %v1164 = vadd.f32 %v1003, %v1163
        %v1165 = vpop.f32.mrb[0].mxu0
        %v1166 = vpop.f32.mrb[0].mxu0
        %v1167 = vadd.f32 %v1006, %v1166
        %v1168 = vpop.f32.mrb[0].mxu0
        %1169 = vmatprep.mubr.bf16.mxu0 %v603
        %1170 = vmatmul.mubr.bf16.gmra.mrb[0].mxu0 %v602
        %v1171 = vpop.f32.mrb[0].mxu0
        %v1172 = vadd.f32 %v1011, %v1171
        %v1173 = vpop.f32.mrb[0].mxu0
        %v1174 = vpop.f32.mrb[0].mxu0
        %v1175 = vadd.f32 %v1014, %v1174
        %v1176 = vpop.f32.mrb[0].mxu0
        %1177 = vmatprep.mubr.bf16.mxu0 %v607
        %1178 = vmatmul.mubr.bf16.gmra.mrb[0].mxu0 %v606
        %v1179 = vpop.f32.mrb[0].mxu0
        %v1180 = vadd.f32 %v1019, %v1179
        %v1181 = vpop.f32.mrb[0].mxu0
        %v1182 = vpop.f32.mrb[0].mxu0
        %v1183 = vadd.f32 %v1022, %v1182
        %v1184 = vpop.f32.mrb[0].mxu0
        %1185 = vmatprep.mubr.bf16.mxu0 %v611
        %1186 = vmatmul.mubr.bf16.gmra.mrb[0].mxu0 %v610
        %v1187 = vpop.f32.mrb[0].mxu0
        %v1188 = vadd.f32 %v1027, %v1187
        %v1189 = vpop.f32.mrb[0].mxu0
        %v1190 = vpop.f32.mrb[0].mxu0
        %v1191 = vadd.f32 %v1030, %v1190
        %v1192 = vpop.f32.mrb[0].mxu0
        %1193 = vmatprep.mubr.bf16.mxu0 %v615
        %1194 = vmatmul.mubr.bf16.gmra.mrb[0].mxu0 %v614
        %v1195 = vpop.f32.mrb[0].mxu0
        %v1196 = vadd.f32 %v1035, %v1195
        %v1197 = vpop.f32.mrb[0].mxu0
        %v1198 = vpop.f32.mrb[0].mxu0
        %v1199 = vadd.f32 %v1038, %v1198
        %v1200 = vpop.f32.mrb[0].mxu0
        %1201 = vmatprep.mubr.bf16.mxu0 %v619
        %1202 = vmatmul.mubr.bf16.gmra.mrb[0].mxu0 %v618
        %v1203 = vpop.f32.mrb[0].mxu0
        %v1204 = vadd.f32 %v1043, %v1203
        %v1205 = vpop.f32.mrb[0].mxu0
        %v1206 = vpop.f32.mrb[0].mxu0
        %v1207 = vadd.f32 %v1046, %v1206
        %v1208 = vpop.f32.mrb[0].mxu0
        %1209 = vmatprep.mubr.bf16.mxu0 %v623
        %1210 = vmatmul.mubr.bf16.gmra.mrb[0].mxu0 %v622
        %v1211 = vpop.f32.mrb[0].mxu0
        %v1212 = vadd.f32 %v1051, %v1211
        %v1213 = vpop.f32.mrb[0].mxu0
        %v1214 = vpop.f32.mrb[0].mxu0
        %v1215 = vadd.f32 %v1054, %v1214
        %v1216 = vpop.f32.mrb[0].mxu0
        %1217 = vmatprep.mubr.bf16.mxu0 %v627
        %1218 = vmatmul.mubr.bf16.gmra.mrb[0].mxu0 %v626
        %v1219 = vpop.f32.mrb[0].mxu0
        %v1220 = vadd.f32 %v1059, %v1219
        %v1221 = vpop.f32.mrb[0].mxu0
        %v1222 = vpop.f32.mrb[0].mxu0
        %v1223 = vadd.f32 %v1062, %v1222
        %v1224 = vpop.f32.mrb[0].mxu0
        %1225 = vmatprep.mubr.bf16.mxu0 %v631
        %1226 = vmatmul.mubr.bf16.gmra.mrb[0].mxu0 %v630
        %v1227 = vpop.f32.mrb[0].mxu0
        %v1228 = vadd.f32 %v1067, %v1227
        %v1229 = vpop.f32.mrb[0].mxu0
        %v1230 = vpop.f32.mrb[0].mxu0
        %v1231 = vadd.f32 %v1070, %v1230
        %v1232 = vpop.f32.mrb[0].mxu0
        %1233 = vmatprep.mubr.bf16.mxu0 %v635
        %1234 = vmatmul.mubr.bf16.gmra.mrb[0].mxu0 %v634
        %v1235 = vpop.f32.mrb[0].mxu0
        %v1236 = vadd.f32 %v1075, %v1235
        %v1237 = vpop.f32.mrb[0].mxu0
        %v1238 = vpop.f32.mrb[0].mxu0
        %v1239 = vadd.f32 %v1078, %v1238
        %v1240 = vpop.f32.mrb[0].mxu0
        %1241 = vmatprep.mubr.bf16.mxu0 %v639
        %1242 = vmatmul.mubr.bf16.gmra.mrb[0].mxu0 %v638
        %v1243 = vpop.f32.mrb[0].mxu0
        %v1244 = vadd.f32 %v1083, %v1243
        %v1245 = vpop.f32.mrb[0].mxu0
        %v1246 = vpop.f32.mrb[0].mxu0
        %v1247 = vadd.f32 %v1086, %v1246
        %v1248 = vpop.f32.mrb[0].mxu0
        %1249 = vdwg.mxu0
        %v1250 = vadd.f32 %v640, %v1124
        %v1251 = vadd.f32 %v641, %v1127
        %v1252 = vadd.f32 %v642, %v1132
        %v1253 = vadd.f32 %v643, %v1135
        %v1254 = vadd.f32 %v644, %v1140
        %v1255 = vadd.f32 %v645, %v1143
        %v1256 = vadd.f32 %v646, %v1148
        %v1257 = vadd.f32 %v647, %v1151
        %v1258 = vadd.f32 %v648, %v1156
        %v1259 = vadd.f32 %v649, %v1159
        %v1260 = vadd.f32 %v650, %v1164
        %v1261 = vadd.f32 %v651, %v1167
        %v1262 = vadd.f32 %v652, %v1172
        %v1263 = vadd.f32 %v653, %v1175
        %v1264 = vadd.f32 %v654, %v1180
        %v1265 = vadd.f32 %v655, %v1183
        %v1266 = vadd.f32 %v656, %v1188
        %v1267 = vadd.f32 %v657, %v1191
        %v1268 = vadd.f32 %v658, %v1196
        %v1269 = vadd.f32 %v659, %v1199
        %v1270 = vadd.f32 %v660, %v1204
        %v1271 = vadd.f32 %v661, %v1207
        %v1272 = vadd.f32 %v662, %v1212
        %v1273 = vadd.f32 %v663, %v1215
        %v1274 = vadd.f32 %v664, %v1220
        %v1275 = vadd.f32 %v665, %v1223
        %v1276 = vadd.f32 %v666, %v1228
        %v1277 = vadd.f32 %v667, %v1231
        %v1278 = vadd.f32 %v668, %v1236
        %v1279 = vadd.f32 %v669, %v1239
        %v1280 = vadd.f32 %v670, %v1244
        %v1281 = vadd.f32 %v671, %v1247
        %1282 = vst [vmem:[#allocation2] sm:$0xff] %v1250
        %1283 = vst [vmem:[#allocation2 + $0x8] sm:$0xff] %v1251
        %1284 = vst [vmem:[#allocation2 + $0x10] sm:$0xff] %v1252
        %1285 = vst [vmem:[#allocation2 + $0x18] sm:$0xff] %v1253
        %1286 = vst [vmem:[#allocation2 + $0x20] sm:$0xff] %v1254
        %1287 = vst [vmem:[#allocation2 + $0x28] sm:$0xff] %v1255
        %1288 = vst [vmem:[#allocation2 + $0x30] sm:$0xff] %v1256
        %1289 = vst [vmem:[#allocation2 + $0x38] sm:$0xff] %v1257
        %1290 = vst [vmem:[#allocation2 + $0x40] sm:$0xff] %v1258
        %1291 = vst [vmem:[#allocation2 + $0x48] sm:$0xff] %v1259
        %1292 = vst [vmem:[#allocation2 + $0x50] sm:$0xff] %v1260
        %1293 = vst [vmem:[#allocation2 + $0x58] sm:$0xff] %v1261
        %1294 = vst [vmem:[#allocation2 + $0x60] sm:$0xff] %v1262
        %1295 = vst [vmem:[#allocation2 + $0x68] sm:$0xff] %v1263
        %1296 = vst [vmem:[#allocation2 + $0x70] sm:$0xff] %v1264
        %1297 = vst [vmem:[#allocation2 + $0x78] sm:$0xff] %v1265
        %1298 = vst [vmem:[#allocation2 + $0x80] sm:$0xff] %v1266
        %1299 = vst [vmem:[#allocation2 + $0x88] sm:$0xff] %v1267
        %1300 = vst [vmem:[#allocation2 + $0x90] sm:$0xff] %v1268
        %1301 = vst [vmem:[#allocation2 + $0x98] sm:$0xff] %v1269
        %1302 = vst [vmem:[#allocation2 + $0xa0] sm:$0xff] %v1270
        %1303 = vst [vmem:[#allocation2 + $0xa8] sm:$0xff] %v1271
        %1304 = vst [vmem:[#allocation2 + $0xb0] sm:$0xff] %v1272
        %1305 = vst [vmem:[#allocation2 + $0xb8] sm:$0xff] %v1273
        %1306 = vst [vmem:[#allocation2 + $0xc0] sm:$0xff] %v1274
        %1307 = vst [vmem:[#allocation2 + $0xc8] sm:$0xff] %v1275
        %1308 = vst [vmem:[#allocation2 + $0xd0] sm:$0xff] %v1276
        %1309 = vst [vmem:[#allocation2 + $0xd8] sm:$0xff] %v1277
        %1310 = vst [vmem:[#allocation2 + $0xe0] sm:$0xff] %v1278
        %1311 = vst [vmem:[#allocation2 + $0xe8] sm:$0xff] %v1279
        %1312 = vst [vmem:[#allocation2 + $0xf0] sm:$0xff] %v1280
        %1313 = vst [vmem:[#allocation2 + $0xf8] sm:$0xff] %v1281
        // Predicated region
        $region77: #{tpu_custom_call.1} parent=51 // pred_check
          %p1314 = pneg %p508
        $region78: #{tpu_custom_call.1} parent=51 // pred_check_branch
          %1316 = sbr.rel (%p1314) target = $region80
        $region79: #{tpu_custom_call.1} parent=51 // pred_region
          %v1317 = vld [vmem:[%s489] sm:$0xff]
          %v1318 = vld [vmem:[%s489 + $0x8] sm:$0xff]
          %v1319 = vld [vmem:[%s489 + $0x10] sm:$0xff]
          %v1320 = vld [vmem:[%s489 + $0x18] sm:$0xff]
          %v1321 = vld [vmem:[%s489 + $0x20] sm:$0xff]
          %v1322 = vld [vmem:[%s489 + $0x28] sm:$0xff]
          %v1323 = vld [vmem:[%s489 + $0x30] sm:$0xff]
          %v1324 = vld [vmem:[%s489 + $0x38] sm:$0xff]
          %v1325 = vld [vmem:[%s489 + $0x40] sm:$0xff]
          %v1326 = vld [vmem:[%s489 + $0x48] sm:$0xff]
          %v1327 = vld [vmem:[%s489 + $0x50] sm:$0xff]
          %v1328 = vld [vmem:[%s489 + $0x58] sm:$0xff]
          %v1329 = vld [vmem:[%s489 + $0x60] sm:$0xff]
          %v1330 = vld [vmem:[%s489 + $0x68] sm:$0xff]
          %v1331 = vld [vmem:[%s489 + $0x70] sm:$0xff]
          %v1332 = vld [vmem:[%s489 + $0x78] sm:$0xff]
          %v1333 = vld [vmem:[%s489 + $0x80] sm:$0xff]
          %v1334 = vld [vmem:[%s489 + $0x88] sm:$0xff]
          %v1335 = vld [vmem:[%s489 + $0x90] sm:$0xff]
          %v1336 = vld [vmem:[%s489 + $0x98] sm:$0xff]
          %v1337 = vld [vmem:[%s489 + $0xa0] sm:$0xff]
          %v1338 = vld [vmem:[%s489 + $0xa8] sm:$0xff]
          %v1339 = vld [vmem:[%s489 + $0xb0] sm:$0xff]
          %v1340 = vld [vmem:[%s489 + $0xb8] sm:$0xff]
          %v1341 = vld [vmem:[%s489 + $0xc0] sm:$0xff]
          %v1342 = vld [vmem:[%s489 + $0xc8] sm:$0xff]
          %v1343 = vld [vmem:[%s489 + $0xd0] sm:$0xff]
          %v1344 = vld [vmem:[%s489 + $0xd8] sm:$0xff]
          %v1345 = vld [vmem:[%s489 + $0xe0] sm:$0xff]
          %v1346 = vld [vmem:[%s489 + $0xe8] sm:$0xff]
          %v1347 = vld [vmem:[%s489 + $0xf0] sm:$0xff]
          %v1348 = vld [vmem:[%s489 + $0xf8] sm:$0xff]
          %v1349 = vsub.f32 0.0, %v1317
          %v1350 = vsub.f32 0.0, %v1318
          %v1351 = vsub.f32 0.0, %v1319
          %v1352 = vsub.f32 0.0, %v1320
          %v1353 = vsub.f32 0.0, %v1321
          %v1354 = vsub.f32 0.0, %v1322
          %v1355 = vsub.f32 0.0, %v1323
          %v1356 = vsub.f32 0.0, %v1324
          %v1357 = vsub.f32 0.0, %v1325
          %v1358 = vsub.f32 0.0, %v1326
          %v1359 = vsub.f32 0.0, %v1327
          %v1360 = vsub.f32 0.0, %v1328
          %v1361 = vsub.f32 0.0, %v1329
          %v1362 = vsub.f32 0.0, %v1330
          %v1363 = vsub.f32 0.0, %v1331
          %v1364 = vsub.f32 0.0, %v1332
          %v1365 = vsub.f32 0.0, %v1333
          %v1366 = vsub.f32 0.0, %v1334
          %v1367 = vsub.f32 0.0, %v1335
          %v1368 = vsub.f32 0.0, %v1336
          %v1369 = vsub.f32 0.0, %v1337
          %v1370 = vsub.f32 0.0, %v1338
          %v1371 = vsub.f32 0.0, %v1339
          %v1372 = vsub.f32 0.0, %v1340
          %v1373 = vsub.f32 0.0, %v1341
          %v1374 = vsub.f32 0.0, %v1342
          %v1375 = vsub.f32 0.0, %v1343
          %v1376 = vsub.f32 0.0, %v1344
          %v1377 = vsub.f32 0.0, %v1345
          %v1378 = vsub.f32 0.0, %v1346
          %v1379 = vsub.f32 0.0, %v1347
          %v1380 = vsub.f32 0.0, %v1348
          %v1381 = vld [vmem:[#allocation2] sm:$0xff]
          %v1382 = vld [vmem:[#allocation2 + $0x8] sm:$0xff]
          %v1383 = vld [vmem:[#allocation2 + $0x10] sm:$0xff]
          %v1384 = vld [vmem:[#allocation2 + $0x18] sm:$0xff]
          %v1385 = vld [vmem:[#allocation2 + $0x20] sm:$0xff]
          %v1386 = vld [vmem:[#allocation2 + $0x28] sm:$0xff]
          %v1387 = vld [vmem:[#allocation2 + $0x30] sm:$0xff]
          %v1388 = vld [vmem:[#allocation2 + $0x38] sm:$0xff]
          %v1389 = vld [vmem:[#allocation2 + $0x40] sm:$0xff]
          %v1390 = vld [vmem:[#allocation2 + $0x48] sm:$0xff]
          %v1391 = vld [vmem:[#allocation2 + $0x50] sm:$0xff]
          %v1392 = vld [vmem:[#allocation2 + $0x58] sm:$0xff]
          %v1393 = vld [vmem:[#allocation2 + $0x60] sm:$0xff]
          %v1394 = vld [vmem:[#allocation2 + $0x68] sm:$0xff]
          %v1395 = vld [vmem:[#allocation2 + $0x70] sm:$0xff]
          %v1396 = vld [vmem:[#allocation2 + $0x78] sm:$0xff]
          %v1397 = vld [vmem:[#allocation2 + $0x80] sm:$0xff]
          %v1398 = vld [vmem:[#allocation2 + $0x88] sm:$0xff]
          %v1399 = vld [vmem:[#allocation2 + $0x90] sm:$0xff]
          %v1400 = vld [vmem:[#allocation2 + $0x98] sm:$0xff]
          %v1401 = vld [vmem:[#allocation2 + $0xa0] sm:$0xff]
          %v1402 = vld [vmem:[#allocation2 + $0xa8] sm:$0xff]
          %v1403 = vld [vmem:[#allocation2 + $0xb0] sm:$0xff]
          %v1404 = vld [vmem:[#allocation2 + $0xb8] sm:$0xff]
          %v1405 = vld [vmem:[#allocation2 + $0xc0] sm:$0xff]
          %v1406 = vld [vmem:[#allocation2 + $0xc8] sm:$0xff]
          %v1407 = vld [vmem:[#allocation2 + $0xd0] sm:$0xff]
          %v1408 = vld [vmem:[#allocation2 + $0xd8] sm:$0xff]
          %v1409 = vld [vmem:[#allocation2 + $0xe0] sm:$0xff]
          %v1410 = vld [vmem:[#allocation2 + $0xe8] sm:$0xff]
          %v1411 = vld [vmem:[#allocation2 + $0xf0] sm:$0xff]
          %v1412 = vld [vmem:[#allocation2 + $0xf8] sm:$0xff]
          %1414 = vset.pattern.permute.xlu0 0
          %1415 = vperm.xlu0 %1414, %v1349
          %v1416 = vpop.permute.xlu0 %1415
          %1419 = vset.pattern.permute.xlu0 0
          %1420 = vperm.xlu0 %1419, %v1350
          %v1421 = vpop.permute.xlu0 %1420
          %1424 = vset.pattern.permute.xlu0 0
          %1425 = vperm.xlu0 %1424, %v1351
          %v1426 = vpop.permute.xlu0 %1425
          %1429 = vset.pattern.permute.xlu0 0
          %1430 = vperm.xlu0 %1429, %v1352
          %v1431 = vpop.permute.xlu0 %1430
          %1434 = vset.pattern.permute.xlu0 0
          %1435 = vperm.xlu0 %1434, %v1353
          %v1436 = vpop.permute.xlu0 %1435
          %1439 = vset.pattern.permute.xlu0 0
          %1440 = vperm.xlu0 %1439, %v1354
          %v1441 = vpop.permute.xlu0 %1440
          %1444 = vset.pattern.permute.xlu0 0
          %1445 = vperm.xlu0 %1444, %v1355
          %v1446 = vpop.permute.xlu0 %1445
          %1449 = vset.pattern.permute.xlu0 0
          %1450 = vperm.xlu0 %1449, %v1356
          %v1451 = vpop.permute.xlu0 %1450
          %1454 = vset.pattern.permute.xlu0 0
          %1455 = vperm.xlu0 %1454, %v1357
          %v1456 = vpop.permute.xlu0 %1455
          %1459 = vset.pattern.permute.xlu0 0
          %1460 = vperm.xlu0 %1459, %v1358
          %v1461 = vpop.permute.xlu0 %1460
          %1464 = vset.pattern.permute.xlu0 0
          %1465 = vperm.xlu0 %1464, %v1359
          %v1466 = vpop.permute.xlu0 %1465
          %1469 = vset.pattern.permute.xlu0 0
          %1470 = vperm.xlu0 %1469, %v1360
          %v1471 = vpop.permute.xlu0 %1470
          %1474 = vset.pattern.permute.xlu0 0
          %1475 = vperm.xlu0 %1474, %v1361
          %v1476 = vpop.permute.xlu0 %1475
          %1479 = vset.pattern.permute.xlu0 0
          %1480 = vperm.xlu0 %1479, %v1362
          %v1481 = vpop.permute.xlu0 %1480
          %1484 = vset.pattern.permute.xlu0 0
          %1485 = vperm.xlu0 %1484, %v1363
          %v1486 = vpop.permute.xlu0 %1485
          %1489 = vset.pattern.permute.xlu0 0
          %1490 = vperm.xlu0 %1489, %v1364
          %v1491 = vpop.permute.xlu0 %1490
          %1494 = vset.pattern.permute.xlu0 0
          %1495 = vperm.xlu0 %1494, %v1365
          %v1496 = vpop.permute.xlu0 %1495
          %1499 = vset.pattern.permute.xlu0 0
          %1500 = vperm.xlu0 %1499, %v1366
          %v1501 = vpop.permute.xlu0 %1500
          %1504 = vset.pattern.permute.xlu0 0
          %1505 = vperm.xlu0 %1504, %v1367
          %v1506 = vpop.permute.xlu0 %1505
          %1509 = vset.pattern.permute.xlu0 0
          %1510 = vperm.xlu0 %1509, %v1368
          %v1511 = vpop.permute.xlu0 %1510
          %1514 = vset.pattern.permute.xlu0 0
          %1515 = vperm.xlu0 %1514, %v1369
          %v1516 = vpop.permute.xlu0 %1515
          %1519 = vset.pattern.permute.xlu0 0
          %1520 = vperm.xlu0 %1519, %v1370
          %v1521 = vpop.permute.xlu0 %1520
          %1524 = vset.pattern.permute.xlu0 0
          %1525 = vperm.xlu0 %1524, %v1371
          %v1526 = vpop.permute.xlu0 %1525
          %1529 = vset.pattern.permute.xlu0 0
          %1530 = vperm.xlu0 %1529, %v1372
          %v1531 = vpop.permute.xlu0 %1530
          %1534 = vset.pattern.permute.xlu0 0
          %1535 = vperm.xlu0 %1534, %v1373
          %v1536 = vpop.permute.xlu0 %1535
          %1539 = vset.pattern.permute.xlu0 0
          %1540 = vperm.xlu0 %1539, %v1374
          %v1541 = vpop.permute.xlu0 %1540
          %1544 = vset.pattern.permute.xlu0 0
          %1545 = vperm.xlu0 %1544, %v1375
          %v1546 = vpop.permute.xlu0 %1545
          %1549 = vset.pattern.permute.xlu0 0
          %1550 = vperm.xlu0 %1549, %v1376
          %v1551 = vpop.permute.xlu0 %1550
          %1554 = vset.pattern.permute.xlu0 0
          %1555 = vperm.xlu0 %1554, %v1377
          %v1556 = vpop.permute.xlu0 %1555
          %1559 = vset.pattern.permute.xlu0 0
          %1560 = vperm.xlu0 %1559, %v1378
          %v1561 = vpop.permute.xlu0 %1560
          %1564 = vset.pattern.permute.xlu0 0
          %1565 = vperm.xlu0 %1564, %v1379
          %v1566 = vpop.permute.xlu0 %1565
          %1569 = vset.pattern.permute.xlu0 0
          %1570 = vperm.xlu0 %1569, %v1380
          %v1571 = vpop.permute.xlu0 %1570
          %v1573 = vmul.f32 %v1416, %v1381
          %v1574 = vmul.f32 %v1421, %v1382
          %v1575 = vmul.f32 %v1426, %v1383
          %v1576 = vmul.f32 %v1431, %v1384
          %v1577 = vmul.f32 %v1436, %v1385
          %v1578 = vmul.f32 %v1441, %v1386
          %v1579 = vmul.f32 %v1446, %v1387
          %v1580 = vmul.f32 %v1451, %v1388
          %v1581 = vmul.f32 %v1456, %v1389
          %v1582 = vmul.f32 %v1461, %v1390
          %v1583 = vmul.f32 %v1466, %v1391
          %v1584 = vmul.f32 %v1471, %v1392
          %v1585 = vmul.f32 %v1476, %v1393
          %v1586 = vmul.f32 %v1481, %v1394
          %v1587 = vmul.f32 %v1486, %v1395
          %v1588 = vmul.f32 %v1491, %v1396
          %v1589 = vmul.f32 %v1496, %v1397
          %v1590 = vmul.f32 %v1501, %v1398
          %v1591 = vmul.f32 %v1506, %v1399
          %v1592 = vmul.f32 %v1511, %v1400
          %v1593 = vmul.f32 %v1516, %v1401
          %v1594 = vmul.f32 %v1521, %v1402
          %v1595 = vmul.f32 %v1526, %v1403
          %v1596 = vmul.f32 %v1531, %v1404
          %v1597 = vmul.f32 %v1536, %v1405
          %v1598 = vmul.f32 %v1541, %v1406
          %v1599 = vmul.f32 %v1546, %v1407
          %v1600 = vmul.f32 %v1551, %v1408
          %v1601 = vmul.f32 %v1556, %v1409
          %v1602 = vmul.f32 %v1561, %v1410
          %v1603 = vmul.f32 %v1566, %v1411
          %v1604 = vmul.f32 %v1571, %v1412
          %v1605 = vpack.c.bf16 %v1574, %v1573
          %v1606 = vpack.c.bf16 %v1576, %v1575
          %v1607 = vpack.c.bf16 %v1578, %v1577
          %v1608 = vpack.c.bf16 %v1580, %v1579
          %v1609 = vpack.c.bf16 %v1582, %v1581
          %v1610 = vpack.c.bf16 %v1584, %v1583
          %v1611 = vpack.c.bf16 %v1586, %v1585
          %v1612 = vpack.c.bf16 %v1588, %v1587
          %v1613 = vpack.c.bf16 %v1590, %v1589
          %v1614 = vpack.c.bf16 %v1592, %v1591
          %v1615 = vpack.c.bf16 %v1594, %v1593
          %v1616 = vpack.c.bf16 %v1596, %v1595
          %v1617 = vpack.c.bf16 %v1598, %v1597
          %v1618 = vpack.c.bf16 %v1600, %v1599
          %v1619 = vpack.c.bf16 %v1602, %v1601
          %v1620 = vpack.c.bf16 %v1604, %v1603
          %v1621 = vld [vmem:[%s414] sm:$0xf]
          %v1622 = vld [vmem:[%s414 + $0x4] sm:$0xf]
          %v1623 = vld [vmem:[%s414 + $0x8] sm:$0xf]
          %v1624 = vld [vmem:[%s414 + $0xc] sm:$0xf]
          %v1625 = vld [vmem:[%s414 + $0x10] sm:$0xf]
          %v1626 = vld [vmem:[%s414 + $0x14] sm:$0xf]
          %v1627 = vld [vmem:[%s414 + $0x18] sm:$0xf]
          %v1628 = vld [vmem:[%s414 + $0x1c] sm:$0xf]
          %v1629 = vld [vmem:[%s414 + $0x20] sm:$0xf]
          %v1630 = vld [vmem:[%s414 + $0x24] sm:$0xf]
          %v1631 = vld [vmem:[%s414 + $0x28] sm:$0xf]
          %v1632 = vld [vmem:[%s414 + $0x2c] sm:$0xf]
          %v1633 = vld [vmem:[%s414 + $0x30] sm:$0xf]
          %v1634 = vld [vmem:[%s414 + $0x34] sm:$0xf]
          %v1635 = vld [vmem:[%s414 + $0x38] sm:$0xf]
          %v1636 = vld [vmem:[%s414 + $0x3c] sm:$0xf]
          %v1637 = vld [vmem:[%s414 + $0x40] sm:$0xf]
          %v1638 = vld [vmem:[%s414 + $0x44] sm:$0xf]
          %v1639 = vld [vmem:[%s414 + $0x48] sm:$0xf]
          %v1640 = vld [vmem:[%s414 + $0x4c] sm:$0xf]
          %v1641 = vld [vmem:[%s414 + $0x50] sm:$0xf]
          %v1642 = vld [vmem:[%s414 + $0x54] sm:$0xf]
          %v1643 = vld [vmem:[%s414 + $0x58] sm:$0xf]
          %v1644 = vld [vmem:[%s414 + $0x5c] sm:$0xf]
          %v1645 = vld [vmem:[%s414 + $0x60] sm:$0xf]
          %v1646 = vld [vmem:[%s414 + $0x64] sm:$0xf]
          %v1647 = vld [vmem:[%s414 + $0x68] sm:$0xf]
          %v1648 = vld [vmem:[%s414 + $0x6c] sm:$0xf]
          %v1649 = vld [vmem:[%s414 + $0x70] sm:$0xf]
          %v1650 = vld [vmem:[%s414 + $0x74] sm:$0xf]
          %v1651 = vld [vmem:[%s414 + $0x78] sm:$0xf]
          %v1652 = vld [vmem:[%s414 + $0x7c] sm:$0xf]
          %v1653 = vld [vmem:[#allocation8] sm:$0xf]
          %v1654 = vld [vmem:[#allocation8 + $0x4] sm:$0xf]
          %v1655 = vld [vmem:[#allocation8 + $0x8] sm:$0xf]
          %v1656 = vld [vmem:[#allocation8 + $0xc] sm:$0xf]
          %v1657 = vld [vmem:[#allocation8 + $0x10] sm:$0xf]
          %v1658 = vld [vmem:[#allocation8 + $0x14] sm:$0xf]
          %v1659 = vld [vmem:[#allocation8 + $0x18] sm:$0xf]
          %v1660 = vld [vmem:[#allocation8 + $0x1c] sm:$0xf]
          %v1661 = vld [vmem:[#allocation8 + $0x20] sm:$0xf]
          %v1662 = vld [vmem:[#allocation8 + $0x24] sm:$0xf]
          %v1663 = vld [vmem:[#allocation8 + $0x28] sm:$0xf]
          %v1664 = vld [vmem:[#allocation8 + $0x2c] sm:$0xf]
          %v1665 = vld [vmem:[#allocation8 + $0x30] sm:$0xf]
          %v1666 = vld [vmem:[#allocation8 + $0x34] sm:$0xf]
          %v1667 = vld [vmem:[#allocation8 + $0x38] sm:$0xf]
          %v1668 = vld [vmem:[#allocation8 + $0x3c] sm:$0xf]
          %v1669 = vld [vmem:[#allocation9] sm:$0xf]
          %v1670 = vld [vmem:[#allocation9 + $0x4] sm:$0xf]
          %v1671 = vld [vmem:[#allocation9 + $0x8] sm:$0xf]
          %v1672 = vld [vmem:[#allocation9 + $0xc] sm:$0xf]
          %v1673 = vld [vmem:[#allocation9 + $0x10] sm:$0xf]
          %v1674 = vld [vmem:[#allocation9 + $0x14] sm:$0xf]
          %v1675 = vld [vmem:[#allocation9 + $0x18] sm:$0xf]
          %v1676 = vld [vmem:[#allocation9 + $0x1c] sm:$0xf]
          %v1677 = vld [vmem:[#allocation9 + $0x20] sm:$0xf]
          %v1678 = vld [vmem:[#allocation9 + $0x24] sm:$0xf]
          %v1679 = vld [vmem:[#allocation9 + $0x28] sm:$0xf]
          %v1680 = vld [vmem:[#allocation9 + $0x2c] sm:$0xf]
          %v1681 = vld [vmem:[#allocation9 + $0x30] sm:$0xf]
          %v1682 = vld [vmem:[#allocation9 + $0x34] sm:$0xf]
          %v1683 = vld [vmem:[#allocation9 + $0x38] sm:$0xf]
          %v1684 = vld [vmem:[#allocation9 + $0x3c] sm:$0xf]
          %v1701 = vunpack.c.l.b16 %v1669
          %v1702 = vunpack.c.l.b16 %v1670
          %v1703 = vunpack.c.l.b16 %v1671
          %v1704 = vunpack.c.l.b16 %v1672
          %v1705 = vunpack.c.l.b16 %v1673
          %v1706 = vunpack.c.l.b16 %v1674
          %v1707 = vunpack.c.l.b16 %v1675
          %v1708 = vunpack.c.l.b16 %v1676
          %v1709 = vunpack.c.l.b16 %v1677
          %v1710 = vunpack.c.l.b16 %v1678
          %v1711 = vunpack.c.l.b16 %v1679
          %v1712 = vunpack.c.l.b16 %v1680
          %v1713 = vunpack.c.l.b16 %v1681
          %v1714 = vunpack.c.l.b16 %v1682
          %v1715 = vunpack.c.l.b16 %v1683
          %v1716 = vunpack.c.l.b16 %v1684
          %v1717 = vpack.c.b16 %v1702, %v1701
          %v1718 = vpack.c.b16 %v1704, %v1703
          %v1719 = vpack.c.b16 %v1706, %v1705
          %v1720 = vpack.c.b16 %v1708, %v1707
          %v1721 = vpack.c.b16 %v1710, %v1709
          %v1722 = vpack.c.b16 %v1712, %v1711
          %v1723 = vpack.c.b16 %v1714, %v1713
          %v1724 = vpack.c.b16 %v1716, %v1715
          %1733 = vmatprep.subr.bf16.mxu0 0
          %1734 = vmatpush1.bf16.msra.mxu0 %v1717
          %1735 = vmatprep.subr.bf16.mxu0 0
          %1736 = vmatpush1.bf16.msra.mxu0 %v1718
          %1737 = vmatprep.subr.bf16.mxu0 0
          %1738 = vmatpush1.bf16.msra.mxu0 %v1719
          %1739 = vmatprep.subr.bf16.mxu0 0
          %1740 = vmatpush1.bf16.msra.mxu0 %v1720
          %1741 = vmatprep.subr.bf16.mxu0 0
          %1742 = vmatpush1.bf16.msra.mxu0 %v1721
          %1743 = vmatprep.subr.bf16.mxu0 0
          %1744 = vmatpush1.bf16.msra.mxu0 %v1722
          %1745 = vmatprep.subr.bf16.mxu0 0
          %1746 = vmatpush1.bf16.msra.mxu0 %v1723
          %1747 = vmatprep.subr.bf16.mxu0 0
          %1748 = vmatpush1.bf16.msra.mxu0 %v1724
          %1749 = vmatprep.subr.bf16.mxu0 0
          %1750 = vmatpush1.bf16.msra.mxu0 0
          %1751 = vmatprep.subr.bf16.mxu0 0
          %1752 = vmatpush1.bf16.msra.mxu0 0
          %1753 = vmatprep.subr.bf16.mxu0 0
          %1754 = vmatpush1.bf16.msra.mxu0 0
          %1755 = vmatprep.subr.bf16.mxu0 0
          %1756 = vmatpush1.bf16.msra.mxu0 0
          %1757 = vmatprep.subr.bf16.mxu0 0
          %1758 = vmatpush1.bf16.msra.mxu0 0
          %1759 = vmatprep.subr.bf16.mxu0 0
          %1760 = vmatpush1.bf16.msra.mxu0 0
          %1761 = vmatprep.subr.bf16.mxu0 0
          %1762 = vmatpush1.bf16.msra.mxu0 0
          %1763 = vmatprep.subr.bf16.mxu0 0
          %1764 = vmatpush1.bf16.msra.mxu0 0
          %1765 = vmatprep.mubr.bf16.mxu0 0
          %1766 = vmatmul.mubr.bf16.gmra.mrb[0].mxu0 %v1605
          %v1767 = vpop.f32.mrb[0].mxu0
          %v1768 = vadd.f32 0.0, %v1767
          %v1769 = vpop.f32.mrb[0].mxu0
          %v1770 = vpop.f32.mrb[0].mxu0
          %v1771 = vadd.f32 0.0, %v1770
          %v1772 = vpop.f32.mrb[0].mxu0
          %1773 = vmatprep.mubr.bf16.mxu0 0
          %1774 = vmatmul.mubr.bf16.gmra.mrb[0].mxu0 %v1606
          %v1775 = vpop.f32.mrb[0].mxu0
          %v1776 = vadd.f32 0.0, %v1775
          %v1777 = vpop.f32.mrb[0].mxu0
          %v1778 = vpop.f32.mrb[0].mxu0
          %v1779 = vadd.f32 0.0, %v1778
          %v1780 = vpop.f32.mrb[0].mxu0
          %1781 = vmatprep.mubr.bf16.mxu0 0
          %1782 = vmatmul.mubr.bf16.gmra.mrb[0].mxu0 %v1607
          %v1783 = vpop.f32.mrb[0].mxu0
          %v1784 = vadd.f32 0.0, %v1783
          %v1785 = vpop.f32.mrb[0].mxu0
          %v1786 = vpop.f32.mrb[0].mxu0
          %v1787 = vadd.f32 0.0, %v1786
          %v1788 = vpop.f32.mrb[0].mxu0
          %1789 = vmatprep.mubr.bf16.mxu0 0
          %1790 = vmatmul.mubr.bf16.gmra.mrb[0].mxu0 %v1608
          %v1791 = vpop.f32.mrb[0].mxu0
          %v1792 = vadd.f32 0.0, %v1791
          %v1793 = vpop.f32.mrb[0].mxu0
          %v1794 = vpop.f32.mrb[0].mxu0
          %v1795 = vadd.f32 0.0, %v1794
          %v1796 = vpop.f32.mrb[0].mxu0
          %1797 = vmatprep.mubr.bf16.mxu0 0
          %1798 = vmatmul.mubr.bf16.gmra.mrb[0].mxu0 %v1609
          %v1799 = vpop.f32.mrb[0].mxu0
          %v1800 = vadd.f32 0.0, %v1799
          %v1801 = vpop.f32.mrb[0].mxu0
          %v1802 = vpop.f32.mrb[0].mxu0
          %v1803 = vadd.f32 0.0, %v1802
          %v1804 = vpop.f32.mrb[0].mxu0
          %1805 = vmatprep.mubr.bf16.mxu0 0
          %1806 = vmatmul.mubr.bf16.gmra.mrb[0].mxu0 %v1610
          %v1807 = vpop.f32.mrb[0].mxu0
          %v1808 = vadd.f32 0.0, %v1807
          %v1809 = vpop.f32.mrb[0].mxu0
          %v1810 = vpop.f32.mrb[0].mxu0
          %v1811 = vadd.f32 0.0, %v1810
          %v1812 = vpop.f32.mrb[0].mxu0
          %1813 = vmatprep.mubr.bf16.mxu0 0
          %1814 = vmatmul.mubr.bf16.gmra.mrb[0].mxu0 %v1611
          %v1815 = vpop.f32.mrb[0].mxu0
          %v1816 = vadd.f32 0.0, %v1815
          %v1817 = vpop.f32.mrb[0].mxu0
          %v1818 = vpop.f32.mrb[0].mxu0
          %v1819 = vadd.f32 0.0, %v1818
          %v1820 = vpop.f32.mrb[0].mxu0
          %1821 = vmatprep.mubr.bf16.mxu0 0
          %1822 = vmatmul.mubr.bf16.gmra.mrb[0].mxu0 %v1612
          %v1823 = vpop.f32.mrb[0].mxu0
          %v1824 = vadd.f32 0.0, %v1823
          %v1825 = vpop.f32.mrb[0].mxu0
          %v1826 = vpop.f32.mrb[0].mxu0
          %v1827 = vadd.f32 0.0, %v1826
          %v1828 = vpop.f32.mrb[0].mxu0
          %1829 = vmatprep.mubr.bf16.mxu0 0
          %1830 = vmatmul.mubr.bf16.gmra.mrb[0].mxu0 %v1613
          %v1831 = vpop.f32.mrb[0].mxu0
          %v1832 = vadd.f32 0.0, %v1831
          %v1833 = vpop.f32.mrb[0].mxu0
          %v1834 = vpop.f32.mrb[0].mxu0
          %v1835 = vadd.f32 0.0, %v1834
          %v1836 = vpop.f32.mrb[0].mxu0
          %1837 = vmatprep.mubr.bf16.mxu0 0
          %1838 = vmatmul.mubr.bf16.gmra.mrb[0].mxu0 %v1614
          %v1839 = vpop.f32.mrb[0].mxu0
          %v1840 = vadd.f32 0.0, %v1839
          %v1841 = vpop.f32.mrb[0].mxu0
          %v1842 = vpop.f32.mrb[0].mxu0
          %v1843 = vadd.f32 0.0, %v1842
          %v1844 = vpop.f32.mrb[0].mxu0
          %1845 = vmatprep.mubr.bf16.mxu0 0
          %1846 = vmatmul.mubr.bf16.gmra.mrb[0].mxu0 %v1615
          %v1847 = vpop.f32.mrb[0].mxu0
          %v1848 = vadd.f32 0.0, %v1847
          %v1849 = vpop.f32.mrb[0].mxu0
          %v1850 = vpop.f32.mrb[0].mxu0
          %v1851 = vadd.f32 0.0, %v1850
          %v1852 = vpop.f32.mrb[0].mxu0
          %1853 = vmatprep.mubr.bf16.mxu0 0
          %1854 = vmatmul.mubr.bf16.gmra.mrb[0].mxu0 %v1616
          %v1855 = vpop.f32.mrb[0].mxu0
          %v1856 = vadd.f32 0.0, %v1855
          %v1857 = vpop.f32.mrb[0].mxu0
          %v1858 = vpop.f32.mrb[0].mxu0
          %v1859 = vadd.f32 0.0, %v1858
          %v1860 = vpop.f32.mrb[0].mxu0
          %1861 = vmatprep.mubr.bf16.mxu0 0
          %1862 = vmatmul.mubr.bf16.gmra.mrb[0].mxu0 %v1617
          %v1863 = vpop.f32.mrb[0].mxu0
          %v1864 = vadd.f32 0.0, %v1863
          %v1865 = vpop.f32.mrb[0].mxu0
          %v1866 = vpop.f32.mrb[0].mxu0
          %v1867 = vadd.f32 0.0, %v1866
          %v1868 = vpop.f32.mrb[0].mxu0
          %1869 = vmatprep.mubr.bf16.mxu0 0
          %1870 = vmatmul.mubr.bf16.gmra.mrb[0].mxu0 %v1618
          %v1871 = vpop.f32.mrb[0].mxu0
          %v1872 = vadd.f32 0.0, %v1871
          %v1873 = vpop.f32.mrb[0].mxu0
          %v1874 = vpop.f32.mrb[0].mxu0
          %v1875 = vadd.f32 0.0, %v1874
          %v1876 = vpop.f32.mrb[0].mxu0
          %1877 = vmatprep.mubr.bf16.mxu0 0
          %1878 = vmatmul.mubr.bf16.gmra.mrb[0].mxu0 %v1619
          %v1879 = vpop.f32.mrb[0].mxu0
          %v1880 = vadd.f32 0.0, %v1879
          %v1881 = vpop.f32.mrb[0].mxu0
          %v1882 = vpop.f32.mrb[0].mxu0
          %v1883 = vadd.f32 0.0, %v1882
          %v1884 = vpop.f32.mrb[0].mxu0
          %1885 = vmatprep.mubr.bf16.mxu0 0
          %1886 = vmatmul.mubr.bf16.gmra.mrb[0].mxu0 %v1620
          %v1887 = vpop.f32.mrb[0].mxu0
          %v1888 = vadd.f32 0.0, %v1887
          %v1889 = vpop.f32.mrb[0].mxu0
          %v1890 = vpop.f32.mrb[0].mxu0
          %v1891 = vadd.f32 0.0, %v1890
          %v1892 = vpop.f32.mrb[0].mxu0
          %1893 = vdwg.mxu0
          %v1926 = vunpack.c.l.b16 %v1621
          %v1927 = vunpack.c.l.b16 %v1622
          %v1928 = vunpack.c.l.b16 %v1623
          %v1929 = vunpack.c.l.b16 %v1624
          %v1930 = vunpack.c.l.b16 %v1625
          %v1931 = vunpack.c.l.b16 %v1626
          %v1932 = vunpack.c.l.b16 %v1627
          %v1933 = vunpack.c.l.b16 %v1628
          %v1934 = vunpack.c.l.b16 %v1629
          %v1935 = vunpack.c.l.b16 %v1630
          %v1936 = vunpack.c.l.b16 %v1631
          %v1937 = vunpack.c.l.b16 %v1632
          %v1938 = vunpack.c.l.b16 %v1633
          %v1939 = vunpack.c.l.b16 %v1634
          %v1940 = vunpack.c.l.b16 %v1635
          %v1941 = vunpack.c.l.b16 %v1636
          %v1942 = vunpack.c.l.b16 %v1637
          %v1943 = vunpack.c.l.b16 %v1638
          %v1944 = vunpack.c.l.b16 %v1639
          %v1945 = vunpack.c.l.b16 %v1640
          %v1946 = vunpack.c.l.b16 %v1641
          %v1947 = vunpack.c.l.b16 %v1642
          %v1948 = vunpack.c.l.b16 %v1643
          %v1949 = vunpack.c.l.b16 %v1644
          %v1950 = vunpack.c.l.b16 %v1645
          %v1951 = vunpack.c.l.b16 %v1646
          %v1952 = vunpack.c.l.b16 %v1647
          %v1953 = vunpack.c.l.b16 %v1648
          %v1954 = vunpack.c.l.b16 %v1649
          %v1955 = vunpack.c.l.b16 %v1650
          %v1956 = vunpack.c.l.b16 %v1651
          %v1957 = vunpack.c.l.b16 %v1652
          %v1958 = vpack.c.b16 %v1927, %v1926
          %v1959 = vpack.c.b16 %v1929, %v1928
          %v1960 = vpack.c.b16 %v1931, %v1930
          %v1961 = vpack.c.b16 %v1933, %v1932
          %v1962 = vpack.c.b16 %v1935, %v1934
          %v1963 = vpack.c.b16 %v1937, %v1936
          %v1964 = vpack.c.b16 %v1939, %v1938
          %v1965 = vpack.c.b16 %v1941, %v1940
          %v1966 = vpack.c.b16 %v1943, %v1942
          %v1967 = vpack.c.b16 %v1945, %v1944
          %v1968 = vpack.c.b16 %v1947, %v1946
          %v1969 = vpack.c.b16 %v1949, %v1948
          %v1970 = vpack.c.b16 %v1951, %v1950
          %v1971 = vpack.c.b16 %v1953, %v1952
          %v1972 = vpack.c.b16 %v1955, %v1954
          %v1973 = vpack.c.b16 %v1957, %v1956
          %v2006 = vunpack.c.l.b16 %v1653
          %v2007 = vunpack.c.l.b16 %v1654
          %v2008 = vunpack.c.l.b16 %v1655
          %v2009 = vunpack.c.l.b16 %v1656
          %v2010 = vunpack.c.l.b16 %v1657
          %v2011 = vunpack.c.l.b16 %v1658
          %v2012 = vunpack.c.l.b16 %v1659
          %v2013 = vunpack.c.l.b16 %v1660
          %v2014 = vunpack.c.l.b16 %v1661
          %v2015 = vunpack.c.l.b16 %v1662
          %v2016 = vunpack.c.l.b16 %v1663
          %v2017 = vunpack.c.l.b16 %v1664
          %v2018 = vunpack.c.l.b16 %v1665
          %v2019 = vunpack.c.l.b16 %v1666
          %v2020 = vunpack.c.l.b16 %v1667
          %v2021 = vunpack.c.l.b16 %v1668
          %v2022 = vpack.c.b16 %v2007, %v2006
          %v2023 = vpack.c.b16 %v2009, %v2008
          %v2024 = vpack.c.b16 %v2011, %v2010
          %v2025 = vpack.c.b16 %v2013, %v2012
          %v2026 = vpack.c.b16 %v2015, %v2014
          %v2027 = vpack.c.b16 %v2017, %v2016
          %v2028 = vpack.c.b16 %v2019, %v2018
          %v2029 = vpack.c.b16 %v2021, %v2020
          %2038 = vmatprep.subr.bf16.mxu0 0
          %2039 = vmatpush1.bf16.msra.mxu0 %v2022
          %2040 = vmatprep.subr.bf16.mxu0 0
          %2041 = vmatpush1.bf16.msra.mxu0 %v2023
          %2042 = vmatprep.subr.bf16.mxu0 0
          %2043 = vmatpush1.bf16.msra.mxu0 %v2024
          %2044 = vmatprep.subr.bf16.mxu0 0
          %2045 = vmatpush1.bf16.msra.mxu0 %v2025
          %2046 = vmatprep.subr.bf16.mxu0 0
          %2047 = vmatpush1.bf16.msra.mxu0 %v2026
          %2048 = vmatprep.subr.bf16.mxu0 0
          %2049 = vmatpush1.bf16.msra.mxu0 %v2027
          %2050 = vmatprep.subr.bf16.mxu0 0
          %2051 = vmatpush1.bf16.msra.mxu0 %v2028
          %2052 = vmatprep.subr.bf16.mxu0 0
          %2053 = vmatpush1.bf16.msra.mxu0 %v2029
          %2054 = vmatprep.subr.bf16.mxu0 0
          %2055 = vmatpush1.bf16.msra.mxu0 0
          %2056 = vmatprep.subr.bf16.mxu0 0
          %2057 = vmatpush1.bf16.msra.mxu0 0
          %2058 = vmatprep.subr.bf16.mxu0 0
          %2059 = vmatpush1.bf16.msra.mxu0 0
          %2060 = vmatprep.subr.bf16.mxu0 0
          %2061 = vmatpush1.bf16.msra.mxu0 0
          %2062 = vmatprep.subr.bf16.mxu0 0
          %2063 = vmatpush1.bf16.msra.mxu0 0
          %2064 = vmatprep.subr.bf16.mxu0 0
          %2065 = vmatpush1.bf16.msra.mxu0 0
          %2066 = vmatprep.subr.bf16.mxu0 0
          %2067 = vmatpush1.bf16.msra.mxu0 0
          %2068 = vmatprep.subr.bf16.mxu0 0
          %2069 = vmatpush1.bf16.msra.mxu0 0
          %2070 = vmatprep.mubr.bf16.mxu0 0
          %2071 = vmatmul.mubr.bf16.gmra.mrb[0].mxu0 %v1958
          %v2072 = vpop.f32.mrb[0].mxu0
          %v2073 = vadd.f32 %v1768, %v2072
          %v2074 = vpop.f32.mrb[0].mxu0
          %v2075 = vpop.f32.mrb[0].mxu0
          %v2076 = vadd.f32 %v1771, %v2075
          %v2077 = vpop.f32.mrb[0].mxu0
          %2078 = vmatprep.mubr.bf16.mxu0 0
          %2079 = vmatmul.mubr.bf16.gmra.mrb[0].mxu0 %v1959
          %v2080 = vpop.f32.mrb[0].mxu0
          %v2081 = vadd.f32 %v1776, %v2080
          %v2082 = vpop.f32.mrb[0].mxu0
          %v2083 = vpop.f32.mrb[0].mxu0
          %v2084 = vadd.f32 %v1779, %v2083
          %v2085 = vpop.f32.mrb[0].mxu0
          %2086 = vmatprep.mubr.bf16.mxu0 0
          %2087 = vmatmul.mubr.bf16.gmra.mrb[0].mxu0 %v1960
          %v2088 = vpop.f32.mrb[0].mxu0
          %v2089 = vadd.f32 %v1784, %v2088
          %v2090 = vpop.f32.mrb[0].mxu0
          %v2091 = vpop.f32.mrb[0].mxu0
          %v2092 = vadd.f32 %v1787, %v2091
          %v2093 = vpop.f32.mrb[0].mxu0
          %2094 = vmatprep.mubr.bf16.mxu0 0
          %2095 = vmatmul.mubr.bf16.gmra.mrb[0].mxu0 %v1961
          %v2096 = vpop.f32.mrb[0].mxu0
          %v2097 = vadd.f32 %v1792, %v2096
          %v2098 = vpop.f32.mrb[0].mxu0
          %v2099 = vpop.f32.mrb[0].mxu0
          %v2100 = vadd.f32 %v1795, %v2099
          %v2101 = vpop.f32.mrb[0].mxu0
          %2102 = vmatprep.mubr.bf16.mxu0 0
          %2103 = vmatmul.mubr.bf16.gmra.mrb[0].mxu0 %v1962
          %v2104 = vpop.f32.mrb[0].mxu0
          %v2105 = vadd.f32 %v1800, %v2104
          %v2106 = vpop.f32.mrb[0].mxu0
          %v2107 = vpop.f32.mrb[0].mxu0
          %v2108 = vadd.f32 %v1803, %v2107
          %v2109 = vpop.f32.mrb[0].mxu0
          %2110 = vmatprep.mubr.bf16.mxu0 0
          %2111 = vmatmul.mubr.bf16.gmra.mrb[0].mxu0 %v1963
          %v2112 = vpop.f32.mrb[0].mxu0
          %v2113 = vadd.f32 %v1808, %v2112
          %v2114 = vpop.f32.mrb[0].mxu0
          %v2115 = vpop.f32.mrb[0].mxu0
          %v2116 = vadd.f32 %v1811, %v2115
          %v2117 = vpop.f32.mrb[0].mxu0
          %2118 = vmatprep.mubr.bf16.mxu0 0
          %2119 = vmatmul.mubr.bf16.gmra.mrb[0].mxu0 %v1964
          %v2120 = vpop.f32.mrb[0].mxu0
          %v2121 = vadd.f32 %v1816, %v2120
          %v2122 = vpop.f32.mrb[0].mxu0
          %v2123 = vpop.f32.mrb[0].mxu0
          %v2124 = vadd.f32 %v1819, %v2123
          %v2125 = vpop.f32.mrb[0].mxu0
          %2126 = vmatprep.mubr.bf16.mxu0 0
          %2127 = vmatmul.mubr.bf16.gmra.mrb[0].mxu0 %v1965
          %v2128 = vpop.f32.mrb[0].mxu0
          %v2129 = vadd.f32 %v1824, %v2128
          %v2130 = vpop.f32.mrb[0].mxu0
          %v2131 = vpop.f32.mrb[0].mxu0
          %v2132 = vadd.f32 %v1827, %v2131
          %v2133 = vpop.f32.mrb[0].mxu0
          %2134 = vmatprep.mubr.bf16.mxu0 0
          %2135 = vmatmul.mubr.bf16.gmra.mrb[0].mxu0 %v1966
          %v2136 = vpop.f32.mrb[0].mxu0
          %v2137 = vadd.f32 %v1832, %v2136
          %v2138 = vpop.f32.mrb[0].mxu0
          %v2139 = vpop.f32.mrb[0].mxu0
          %v2140 = vadd.f32 %v1835, %v2139
          %v2141 = vpop.f32.mrb[0].mxu0
          %2142 = vmatprep.mubr.bf16.mxu0 0
          %2143 = vmatmul.mubr.bf16.gmra.mrb[0].mxu0 %v1967
          %v2144 = vpop.f32.mrb[0].mxu0
          %v2145 = vadd.f32 %v1840, %v2144
          %v2146 = vpop.f32.mrb[0].mxu0
          %v2147 = vpop.f32.mrb[0].mxu0
          %v2148 = vadd.f32 %v1843, %v2147
          %v2149 = vpop.f32.mrb[0].mxu0
          %2150 = vmatprep.mubr.bf16.mxu0 0
          %2151 = vmatmul.mubr.bf16.gmra.mrb[0].mxu0 %v1968
          %v2152 = vpop.f32.mrb[0].mxu0
          %v2153 = vadd.f32 %v1848, %v2152
          %v2154 = vpop.f32.mrb[0].mxu0
          %v2155 = vpop.f32.mrb[0].mxu0
          %v2156 = vadd.f32 %v1851, %v2155
          %v2157 = vpop.f32.mrb[0].mxu0
          %2158 = vmatprep.mubr.bf16.mxu0 0
          %2159 = vmatmul.mubr.bf16.gmra.mrb[0].mxu0 %v1969
          %v2160 = vpop.f32.mrb[0].mxu0
          %v2161 = vadd.f32 %v1856, %v2160
          %v2162 = vpop.f32.mrb[0].mxu0
          %v2163 = vpop.f32.mrb[0].mxu0
          %v2164 = vadd.f32 %v1859, %v2163
          %v2165 = vpop.f32.mrb[0].mxu0
          %2166 = vmatprep.mubr.bf16.mxu0 0
          %2167 = vmatmul.mubr.bf16.gmra.mrb[0].mxu0 %v1970
          %v2168 = vpop.f32.mrb[0].mxu0
          %v2169 = vadd.f32 %v1864, %v2168
          %v2170 = vpop.f32.mrb[0].mxu0
          %v2171 = vpop.f32.mrb[0].mxu0
          %v2172 = vadd.f32 %v1867, %v2171
          %v2173 = vpop.f32.mrb[0].mxu0
          %2174 = vmatprep.mubr.bf16.mxu0 0
          %2175 = vmatmul.mubr.bf16.gmra.mrb[0].mxu0 %v1971
          %v2176 = vpop.f32.mrb[0].mxu0
          %v2177 = vadd.f32 %v1872, %v2176
          %v2178 = vpop.f32.mrb[0].mxu0
          %v2179 = vpop.f32.mrb[0].mxu0
          %v2180 = vadd.f32 %v1875, %v2179
          %v2181 = vpop.f32.mrb[0].mxu0
          %2182 = vmatprep.mubr.bf16.mxu0 0
          %2183 = vmatmul.mubr.bf16.gmra.mrb[0].mxu0 %v1972
          %v2184 = vpop.f32.mrb[0].mxu0
          %v2185 = vadd.f32 %v1880, %v2184
          %v2186 = vpop.f32.mrb[0].mxu0
          %v2187 = vpop.f32.mrb[0].mxu0
          %v2188 = vadd.f32 %v1883, %v2187
          %v2189 = vpop.f32.mrb[0].mxu0
          %2190 = vmatprep.mubr.bf16.mxu0 0
          %2191 = vmatmul.mubr.bf16.gmra.mrb[0].mxu0 %v1973
          %v2192 = vpop.f32.mrb[0].mxu0
          %v2193 = vadd.f32 %v1888, %v2192
          %v2194 = vpop.f32.mrb[0].mxu0
          %v2195 = vpop.f32.mrb[0].mxu0
          %v2196 = vadd.f32 %v1891, %v2195
          %v2197 = vpop.f32.mrb[0].mxu0
          %2198 = vdwg.mxu0
          %v2199 = vld [vmem:[%s6] sm:$0x1]
          %v2201 = vlaneseq
          %v2202 = vshrl.u32 %v2201, 7
          %v2203 = vsub.s32 0, %v2202
          %v2204 = vrot.slane %v2199, %v2203
          %v2206 = vadd.f32 %v2073, %v2204
          %v2207 = vadd.f32 %v2076, %v2204
          %v2208 = vadd.f32 %v2081, %v2204
          %v2209 = vadd.f32 %v2084, %v2204
          %v2210 = vadd.f32 %v2089, %v2204
          %v2211 = vadd.f32 %v2092, %v2204
          %v2212 = vadd.f32 %v2097, %v2204
          %v2213 = vadd.f32 %v2100, %v2204
          %v2214 = vadd.f32 %v2105, %v2204
          %v2215 = vadd.f32 %v2108, %v2204
          %v2216 = vadd.f32 %v2113, %v2204
          %v2217 = vadd.f32 %v2116, %v2204
          %v2218 = vadd.f32 %v2121, %v2204
          %v2219 = vadd.f32 %v2124, %v2204
          %v2220 = vadd.f32 %v2129, %v2204
          %v2221 = vadd.f32 %v2132, %v2204
          %v2222 = vadd.f32 %v2137, %v2204
          %v2223 = vadd.f32 %v2140, %v2204
          %v2224 = vadd.f32 %v2145, %v2204
          %v2225 = vadd.f32 %v2148, %v2204
          %v2226 = vadd.f32 %v2153, %v2204
          %v2227 = vadd.f32 %v2156, %v2204
          %v2228 = vadd.f32 %v2161, %v2204
          %v2229 = vadd.f32 %v2164, %v2204
          %v2230 = vadd.f32 %v2169, %v2204
          %v2231 = vadd.f32 %v2172, %v2204
          %v2232 = vadd.f32 %v2177, %v2204
          %v2233 = vadd.f32 %v2180, %v2204
          %v2234 = vadd.f32 %v2185, %v2204
          %v2235 = vadd.f32 %v2188, %v2204
          %v2236 = vadd.f32 %v2193, %v2204
          %v2237 = vadd.f32 %v2196, %v2204
          %v2238 = vmax.f32 %v2206, 0.0
          %v2239 = vmax.f32 %v2207, 0.0
          %v2240 = vmax.f32 %v2208, 0.0
          %v2241 = vmax.f32 %v2209, 0.0
          %v2242 = vmax.f32 %v2210, 0.0
          %v2243 = vmax.f32 %v2211, 0.0
          %v2244 = vmax.f32 %v2212, 0.0
          %v2245 = vmax.f32 %v2213, 0.0
          %v2246 = vmax.f32 %v2214, 0.0
          %v2247 = vmax.f32 %v2215, 0.0
          %v2248 = vmax.f32 %v2216, 0.0
          %v2249 = vmax.f32 %v2217, 0.0
          %v2250 = vmax.f32 %v2218, 0.0
          %v2251 = vmax.f32 %v2219, 0.0
          %v2252 = vmax.f32 %v2220, 0.0
          %v2253 = vmax.f32 %v2221, 0.0
          %v2254 = vmax.f32 %v2222, 0.0
          %v2255 = vmax.f32 %v2223, 0.0
          %v2256 = vmax.f32 %v2224, 0.0
          %v2257 = vmax.f32 %v2225, 0.0
          %v2258 = vmax.f32 %v2226, 0.0
          %v2259 = vmax.f32 %v2227, 0.0
          %v2260 = vmax.f32 %v2228, 0.0
          %v2261 = vmax.f32 %v2229, 0.0
          %v2262 = vmax.f32 %v2230, 0.0
          %v2263 = vmax.f32 %v2231, 0.0
          %v2264 = vmax.f32 %v2232, 0.0
          %v2265 = vmax.f32 %v2233, 0.0
          %v2266 = vmax.f32 %v2234, 0.0
          %v2267 = vmax.f32 %v2235, 0.0
          %v2268 = vmax.f32 %v2236, 0.0
          %v2269 = vmax.f32 %v2237, 0.0
          %v2270 = vpack.c.bf16 %v2239, %v2238
          %v2271 = vpack.c.bf16 %v2241, %v2240
          %v2272 = vpack.c.bf16 %v2243, %v2242
          %v2273 = vpack.c.bf16 %v2245, %v2244
          %v2274 = vpack.c.bf16 %v2247, %v2246
          %v2275 = vpack.c.bf16 %v2249, %v2248
          %v2276 = vpack.c.bf16 %v2251, %v2250
          %v2277 = vpack.c.bf16 %v2253, %v2252
          %v2278 = vpack.c.bf16 %v2255, %v2254
          %v2279 = vpack.c.bf16 %v2257, %v2256
          %v2280 = vpack.c.bf16 %v2259, %v2258
          %v2281 = vpack.c.bf16 %v2261, %v2260
          %v2282 = vpack.c.bf16 %v2263, %v2262
          %v2283 = vpack.c.bf16 %v2265, %v2264
          %v2284 = vpack.c.bf16 %v2267, %v2266
          %v2285 = vpack.c.bf16 %v2269, %v2268
          %v2302 = vunpack.c.l.b16 %v2270
          %v2303 = vunpack.c.h.b16 %v2270
          %v2304 = vunpack.c.l.b16 %v2271
          %v2305 = vunpack.c.h.b16 %v2271
          %v2306 = vunpack.c.l.b16 %v2272
          %v2307 = vunpack.c.h.b16 %v2272
          %v2308 = vunpack.c.l.b16 %v2273
          %v2309 = vunpack.c.h.b16 %v2273
          %v2310 = vunpack.c.l.b16 %v2274
          %v2311 = vunpack.c.h.b16 %v2274
          %v2312 = vunpack.c.l.b16 %v2275
          %v2313 = vunpack.c.h.b16 %v2275
          %v2314 = vunpack.c.l.b16 %v2276
          %v2315 = vunpack.c.h.b16 %v2276
          %v2316 = vunpack.c.l.b16 %v2277
          %v2317 = vunpack.c.h.b16 %v2277
          %v2318 = vunpack.c.l.b16 %v2278
          %v2319 = vunpack.c.h.b16 %v2278
          %v2320 = vunpack.c.l.b16 %v2279
          %v2321 = vunpack.c.h.b16 %v2279
          %v2322 = vunpack.c.l.b16 %v2280
          %v2323 = vunpack.c.h.b16 %v2280
          %v2324 = vunpack.c.l.b16 %v2281
          %v2325 = vunpack.c.h.b16 %v2281
          %v2326 = vunpack.c.l.b16 %v2282
          %v2327 = vunpack.c.h.b16 %v2282
          %v2328 = vunpack.c.l.b16 %v2283
          %v2329 = vunpack.c.h.b16 %v2283
          %v2330 = vunpack.c.l.b16 %v2284
          %v2331 = vunpack.c.h.b16 %v2284
          %v2332 = vunpack.c.l.b16 %v2285
          %v2333 = vunpack.c.h.b16 %v2285
          %v2334 = vpack.c.b16 %v2302, %v2302
          %v2335 = vpack.c.b16 %v2303, %v2303
          %v2336 = vpack.c.b16 %v2304, %v2304
          %v2337 = vpack.c.b16 %v2305, %v2305
          %v2338 = vpack.c.b16 %v2306, %v2306
          %v2339 = vpack.c.b16 %v2307, %v2307
          %v2340 = vpack.c.b16 %v2308, %v2308
          %v2341 = vpack.c.b16 %v2309, %v2309
          %v2342 = vpack.c.b16 %v2310, %v2310
          %v2343 = vpack.c.b16 %v2311, %v2311
          %v2344 = vpack.c.b16 %v2312, %v2312
          %v2345 = vpack.c.b16 %v2313, %v2313
          %v2346 = vpack.c.b16 %v2314, %v2314
          %v2347 = vpack.c.b16 %v2315, %v2315
          %v2348 = vpack.c.b16 %v2316, %v2316
          %v2349 = vpack.c.b16 %v2317, %v2317
          %v2350 = vpack.c.b16 %v2318, %v2318
          %v2351 = vpack.c.b16 %v2319, %v2319
          %v2352 = vpack.c.b16 %v2320, %v2320
          %v2353 = vpack.c.b16 %v2321, %v2321
          %v2354 = vpack.c.b16 %v2322, %v2322
          %v2355 = vpack.c.b16 %v2323, %v2323
          %v2356 = vpack.c.b16 %v2324, %v2324
          %v2357 = vpack.c.b16 %v2325, %v2325
          %v2358 = vpack.c.b16 %v2326, %v2326
          %v2359 = vpack.c.b16 %v2327, %v2327
          %v2360 = vpack.c.b16 %v2328, %v2328
          %v2361 = vpack.c.b16 %v2329, %v2329
          %v2362 = vpack.c.b16 %v2330, %v2330
          %v2363 = vpack.c.b16 %v2331, %v2331
          %v2364 = vpack.c.b16 %v2332, %v2332
          %v2365 = vpack.c.b16 %v2333, %v2333
          %2398 = vst [vmem:[%s477] sm:$0xf] %v2334
          %2399 = vst [vmem:[%s477 + $0x4] sm:$0xf] %v2335
          %2400 = vst [vmem:[%s477 + $0x8] sm:$0xf] %v2336
          %2401 = vst [vmem:[%s477 + $0xc] sm:$0xf] %v2337
          %2402 = vst [vmem:[%s477 + $0x10] sm:$0xf] %v2338
          %2403 = vst [vmem:[%s477 + $0x14] sm:$0xf] %v2339
          %2404 = vst [vmem:[%s477 + $0x18] sm:$0xf] %v2340
          %2405 = vst [vmem:[%s477 + $0x1c] sm:$0xf] %v2341
          %2406 = vst [vmem:[%s477 + $0x20] sm:$0xf] %v2342
          %2407 = vst [vmem:[%s477 + $0x24] sm:$0xf] %v2343
          %2408 = vst [vmem:[%s477 + $0x28] sm:$0xf] %v2344
          %2409 = vst [vmem:[%s477 + $0x2c] sm:$0xf] %v2345
          %2410 = vst [vmem:[%s477 + $0x30] sm:$0xf] %v2346
          %2411 = vst [vmem:[%s477 + $0x34] sm:$0xf] %v2347
          %2412 = vst [vmem:[%s477 + $0x38] sm:$0xf] %v2348
          %2413 = vst [vmem:[%s477 + $0x3c] sm:$0xf] %v2349
          %2414 = vst [vmem:[%s477 + $0x40] sm:$0xf] %v2350
          %2415 = vst [vmem:[%s477 + $0x44] sm:$0xf] %v2351
          %2416 = vst [vmem:[%s477 + $0x48] sm:$0xf] %v2352
          %2417 = vst [vmem:[%s477 + $0x4c] sm:$0xf] %v2353
          %2418 = vst [vmem:[%s477 + $0x50] sm:$0xf] %v2354
          %2419 = vst [vmem:[%s477 + $0x54] sm:$0xf] %v2355
          %2420 = vst [vmem:[%s477 + $0x58] sm:$0xf] %v2356
          %2421 = vst [vmem:[%s477 + $0x5c] sm:$0xf] %v2357
          %2422 = vst [vmem:[%s477 + $0x60] sm:$0xf] %v2358
          %2423 = vst [vmem:[%s477 + $0x64] sm:$0xf] %v2359
          %2424 = vst [vmem:[%s477 + $0x68] sm:$0xf] %v2360
          %2425 = vst [vmem:[%s477 + $0x6c] sm:$0xf] %v2361
          %2426 = vst [vmem:[%s477 + $0x70] sm:$0xf] %v2362
          %2427 = vst [vmem:[%s477 + $0x74] sm:$0xf] %v2363
          %2428 = vst [vmem:[%s477 + $0x78] sm:$0xf] %v2364
          %2429 = vst [vmem:[%s477 + $0x7c] sm:$0xf] %v2365
          %v2430 = vld [vmem:[#allocation11] sm:$0xf]
          %v2431 = vld [vmem:[#allocation11 + $0x4] sm:$0xf]
          %v2432 = vld [vmem:[#allocation11 + $0x8] sm:$0xf]
          %v2433 = vld [vmem:[#allocation11 + $0xc] sm:$0xf]
          %v2434 = vld [vmem:[#allocation11 + $0x10] sm:$0xf]
          %v2435 = vld [vmem:[#allocation11 + $0x14] sm:$0xf]
          %v2436 = vld [vmem:[#allocation11 + $0x18] sm:$0xf]
          %v2437 = vld [vmem:[#allocation11 + $0x1c] sm:$0xf]
          %v2438 = vld [vmem:[#allocation11 + $0x20] sm:$0xf]
          %v2439 = vld [vmem:[#allocation11 + $0x24] sm:$0xf]
          %v2440 = vld [vmem:[#allocation11 + $0x28] sm:$0xf]
          %v2441 = vld [vmem:[#allocation11 + $0x2c] sm:$0xf]
          %v2442 = vld [vmem:[#allocation11 + $0x30] sm:$0xf]
          %v2443 = vld [vmem:[#allocation11 + $0x34] sm:$0xf]
          %v2444 = vld [vmem:[#allocation11 + $0x38] sm:$0xf]
          %v2445 = vld [vmem:[#allocation11 + $0x3c] sm:$0xf]
          %v2462 = vunpack.c.l.b16 %v2430
          %v2463 = vunpack.c.l.b16 %v2431
          %v2464 = vunpack.c.l.b16 %v2432
          %v2465 = vunpack.c.l.b16 %v2433
          %v2466 = vunpack.c.l.b16 %v2434
          %v2467 = vunpack.c.l.b16 %v2435
          %v2468 = vunpack.c.l.b16 %v2436
          %v2469 = vunpack.c.l.b16 %v2437
          %v2470 = vunpack.c.l.b16 %v2438
          %v2471 = vunpack.c.l.b16 %v2439
          %v2472 = vunpack.c.l.b16 %v2440
          %v2473 = vunpack.c.l.b16 %v2441
          %v2474 = vunpack.c.l.b16 %v2442
          %v2475 = vunpack.c.l.b16 %v2443
          %v2476 = vunpack.c.l.b16 %v2444
          %v2477 = vunpack.c.l.b16 %v2445
          %v2478 = vpack.c.b16 %v2463, %v2462
          %v2479 = vpack.c.b16 %v2465, %v2464
          %v2480 = vpack.c.b16 %v2467, %v2466
          %v2481 = vpack.c.b16 %v2469, %v2468
          %v2482 = vpack.c.b16 %v2471, %v2470
          %v2483 = vpack.c.b16 %v2473, %v2472
          %v2484 = vpack.c.b16 %v2475, %v2474
          %v2485 = vpack.c.b16 %v2477, %v2476
          %2494 = vmatprep.subr.bf16.mxu0 0
          %2495 = vmatpush1.bf16.msra.mxu0 %v2478
          %2496 = vmatprep.subr.bf16.mxu0 0
          %2497 = vmatpush1.bf16.msra.mxu0 %v2479
          %2498 = vmatprep.subr.bf16.mxu0 0
          %2499 = vmatpush1.bf16.msra.mxu0 %v2480
          %2500 = vmatprep.subr.bf16.mxu0 0
          %2501 = vmatpush1.bf16.msra.mxu0 %v2481
          %2502 = vmatprep.subr.bf16.mxu0 0
          %2503 = vmatpush1.bf16.msra.mxu0 %v2482
          %2504 = vmatprep.subr.bf16.mxu0 0
          %2505 = vmatpush1.bf16.msra.mxu0 %v2483
          %2506 = vmatprep.subr.bf16.mxu0 0
          %2507 = vmatpush1.bf16.msra.mxu0 %v2484
          %2508 = vmatprep.subr.bf16.mxu0 0
          %2509 = vmatpush1.bf16.msra.mxu0 %v2485
          %2510 = vmatprep.subr.bf16.mxu0 0
          %2511 = vmatpush1.bf16.msra.mxu0 0
          %2512 = vmatprep.subr.bf16.mxu0 0
          %2513 = vmatpush1.bf16.msra.mxu0 0
          %2514 = vmatprep.subr.bf16.mxu0 0
          %2515 = vmatpush1.bf16.msra.mxu0 0
          %2516 = vmatprep.subr.bf16.mxu0 0
          %2517 = vmatpush1.bf16.msra.mxu0 0
          %2518 = vmatprep.subr.bf16.mxu0 0
          %2519 = vmatpush1.bf16.msra.mxu0 0
          %2520 = vmatprep.subr.bf16.mxu0 0
          %2521 = vmatpush1.bf16.msra.mxu0 0
          %2522 = vmatprep.subr.bf16.mxu0 0
          %2523 = vmatpush1.bf16.msra.mxu0 0
          %2524 = vmatprep.subr.bf16.mxu0 0
          %2525 = vmatpush1.bf16.msra.mxu0 0
          %2526 = vmatprep.mubr.bf16.mxu0 0
          %2527 = vmatmul.mubr.bf16.gmra.mrb[0].mxu0 %v2270
          %v2528 = vpop.f32.mrb[0].mxu0
          %v2529 = vadd.f32 0.0, %v2528
          %v2530 = vpop.f32.mrb[0].mxu0
          %v2531 = vpop.f32.mrb[0].mxu0
          %v2532 = vadd.f32 0.0, %v2531
          %v2533 = vpop.f32.mrb[0].mxu0
          %2534 = vmatprep.mubr.bf16.mxu0 0
          %2535 = vmatmul.mubr.bf16.gmra.mrb[0].mxu0 %v2271
          %v2536 = vpop.f32.mrb[0].mxu0
          %v2537 = vadd.f32 0.0, %v2536
          %v2538 = vpop.f32.mrb[0].mxu0
          %v2539 = vpop.f32.mrb[0].mxu0
          %v2540 = vadd.f32 0.0, %v2539
          %v2541 = vpop.f32.mrb[0].mxu0
          %2542 = vmatprep.mubr.bf16.mxu0 0
          %2543 = vmatmul.mubr.bf16.gmra.mrb[0].mxu0 %v2272
          %v2544 = vpop.f32.mrb[0].mxu0
          %v2545 = vadd.f32 0.0, %v2544
          %v2546 = vpop.f32.mrb[0].mxu0
          %v2547 = vpop.f32.mrb[0].mxu0
          %v2548 = vadd.f32 0.0, %v2547
          %v2549 = vpop.f32.mrb[0].mxu0
          %2550 = vmatprep.mubr.bf16.mxu0 0
          %2551 = vmatmul.mubr.bf16.gmra.mrb[0].mxu0 %v2273
          %v2552 = vpop.f32.mrb[0].mxu0
          %v2553 = vadd.f32 0.0, %v2552
          %v2554 = vpop.f32.mrb[0].mxu0
          %v2555 = vpop.f32.mrb[0].mxu0
          %v2556 = vadd.f32 0.0, %v2555
          %v2557 = vpop.f32.mrb[0].mxu0
          %2558 = vmatprep.mubr.bf16.mxu0 0
          %2559 = vmatmul.mubr.bf16.gmra.mrb[0].mxu0 %v2274
          %v2560 = vpop.f32.mrb[0].mxu0
          %v2561 = vadd.f32 0.0, %v2560
          %v2562 = vpop.f32.mrb[0].mxu0
          %v2563 = vpop.f32.mrb[0].mxu0
          %v2564 = vadd.f32 0.0, %v2563
          %v2565 = vpop.f32.mrb[0].mxu0
          %2566 = vmatprep.mubr.bf16.mxu0 0
          %2567 = vmatmul.mubr.bf16.gmra.mrb[0].mxu0 %v2275
          %v2568 = vpop.f32.mrb[0].mxu0
          %v2569 = vadd.f32 0.0, %v2568
          %v2570 = vpop.f32.mrb[0].mxu0
          %v2571 = vpop.f32.mrb[0].mxu0
          %v2572 = vadd.f32 0.0, %v2571
          %v2573 = vpop.f32.mrb[0].mxu0
          %2574 = vmatprep.mubr.bf16.mxu0 0
          %2575 = vmatmul.mubr.bf16.gmra.mrb[0].mxu0 %v2276
          %v2576 = vpop.f32.mrb[0].mxu0
          %v2577 = vadd.f32 0.0, %v2576
          %v2578 = vpop.f32.mrb[0].mxu0
          %v2579 = vpop.f32.mrb[0].mxu0
          %v2580 = vadd.f32 0.0, %v2579
          %v2581 = vpop.f32.mrb[0].mxu0
          %2582 = vmatprep.mubr.bf16.mxu0 0
          %2583 = vmatmul.mubr.bf16.gmra.mrb[0].mxu0 %v2277
          %v2584 = vpop.f32.mrb[0].mxu0
          %v2585 = vadd.f32 0.0, %v2584
          %v2586 = vpop.f32.mrb[0].mxu0
          %v2587 = vpop.f32.mrb[0].mxu0
          %v2588 = vadd.f32 0.0, %v2587
          %v2589 = vpop.f32.mrb[0].mxu0
          %2590 = vmatprep.mubr.bf16.mxu0 0
          %2591 = vmatmul.mubr.bf16.gmra.mrb[0].mxu0 %v2278
          %v2592 = vpop.f32.mrb[0].mxu0
          %v2593 = vadd.f32 0.0, %v2592
          %v2594 = vpop.f32.mrb[0].mxu0
          %v2595 = vpop.f32.mrb[0].mxu0
          %v2596 = vadd.f32 0.0, %v2595
          %v2597 = vpop.f32.mrb[0].mxu0
          %2598 = vmatprep.mubr.bf16.mxu0 0
          %2599 = vmatmul.mubr.bf16.gmra.mrb[0].mxu0 %v2279
          %v2600 = vpop.f32.mrb[0].mxu0
          %v2601 = vadd.f32 0.0, %v2600
          %v2602 = vpop.f32.mrb[0].mxu0
          %v2603 = vpop.f32.mrb[0].mxu0
          %v2604 = vadd.f32 0.0, %v2603
          %v2605 = vpop.f32.mrb[0].mxu0
          %2606 = vmatprep.mubr.bf16.mxu0 0
          %2607 = vmatmul.mubr.bf16.gmra.mrb[0].mxu0 %v2280
          %v2608 = vpop.f32.mrb[0].mxu0
          %v2609 = vadd.f32 0.0, %v2608
          %v2610 = vpop.f32.mrb[0].mxu0
          %v2611 = vpop.f32.mrb[0].mxu0
          %v2612 = vadd.f32 0.0, %v2611
          %v2613 = vpop.f32.mrb[0].mxu0
          %2614 = vmatprep.mubr.bf16.mxu0 0
          %2615 = vmatmul.mubr.bf16.gmra.mrb[0].mxu0 %v2281
          %v2616 = vpop.f32.mrb[0].mxu0
          %v2617 = vadd.f32 0.0, %v2616
          %v2618 = vpop.f32.mrb[0].mxu0
          %v2619 = vpop.f32.mrb[0].mxu0
          %v2620 = vadd.f32 0.0, %v2619
          %v2621 = vpop.f32.mrb[0].mxu0
          %2622 = vmatprep.mubr.bf16.mxu0 0
          %2623 = vmatmul.mubr.bf16.gmra.mrb[0].mxu0 %v2282
          %v2624 = vpop.f32.mrb[0].mxu0
          %v2625 = vadd.f32 0.0, %v2624
          %v2626 = vpop.f32.mrb[0].mxu0
          %v2627 = vpop.f32.mrb[0].mxu0
          %v2628 = vadd.f32 0.0, %v2627
          %v2629 = vpop.f32.mrb[0].mxu0
          %2630 = vmatprep.mubr.bf16.mxu0 0
          %2631 = vmatmul.mubr.bf16.gmra.mrb[0].mxu0 %v2283
          %v2632 = vpop.f32.mrb[0].mxu0
          %v2633 = vadd.f32 0.0, %v2632
          %v2634 = vpop.f32.mrb[0].mxu0
          %v2635 = vpop.f32.mrb[0].mxu0
          %v2636 = vadd.f32 0.0, %v2635
          %v2637 = vpop.f32.mrb[0].mxu0
          %2638 = vmatprep.mubr.bf16.mxu0 0
          %2639 = vmatmul.mubr.bf16.gmra.mrb[0].mxu0 %v2284
          %v2640 = vpop.f32.mrb[0].mxu0
          %v2641 = vadd.f32 0.0, %v2640
          %v2642 = vpop.f32.mrb[0].mxu0
          %v2643 = vpop.f32.mrb[0].mxu0
          %v2644 = vadd.f32 0.0, %v2643
          %v2645 = vpop.f32.mrb[0].mxu0
          %2646 = vmatprep.mubr.bf16.mxu0 0
          %2647 = vmatmul.mubr.bf16.gmra.mrb[0].mxu0 %v2285
          %v2648 = vpop.f32.mrb[0].mxu0
          %v2649 = vadd.f32 0.0, %v2648
          %v2650 = vpop.f32.mrb[0].mxu0
          %v2651 = vpop.f32.mrb[0].mxu0
          %v2652 = vadd.f32 0.0, %v2651
          %v2653 = vpop.f32.mrb[0].mxu0
          %2654 = vdwg.mxu0
          %2656 = vset.pattern.permute.xlu0 0
          %2657 = vperm.xlu0 %2656, %v1317
          %v2658 = vpop.permute.xlu0 %2657
          %2661 = vset.pattern.permute.xlu0 0
          %2662 = vperm.xlu0 %2661, %v1318
          %v2663 = vpop.permute.xlu0 %2662
          %2666 = vset.pattern.permute.xlu0 0
          %2667 = vperm.xlu0 %2666, %v1319
          %v2668 = vpop.permute.xlu0 %2667
          %2671 = vset.pattern.permute.xlu0 0
          %2672 = vperm.xlu0 %2671, %v1320
          %v2673 = vpop.permute.xlu0 %2672
          %2676 = vset.pattern.permute.xlu0 0
          %2677 = vperm.xlu0 %2676, %v1321
          %v2678 = vpop.permute.xlu0 %2677
          %2681 = vset.pattern.permute.xlu0 0
          %2682 = vperm.xlu0 %2681, %v1322
          %v2683 = vpop.permute.xlu0 %2682
          %2686 = vset.pattern.permute.xlu0 0
          %2687 = vperm.xlu0 %2686, %v1323
          %v2688 = vpop.permute.xlu0 %2687
          %2691 = vset.pattern.permute.xlu0 0
          %2692 = vperm.xlu0 %2691, %v1324
          %v2693 = vpop.permute.xlu0 %2692
          %2696 = vset.pattern.permute.xlu0 0
          %2697 = vperm.xlu0 %2696, %v1325
          %v2698 = vpop.permute.xlu0 %2697
          %2701 = vset.pattern.permute.xlu0 0
          %2702 = vperm.xlu0 %2701, %v1326
          %v2703 = vpop.permute.xlu0 %2702
          %2706 = vset.pattern.permute.xlu0 0
          %2707 = vperm.xlu0 %2706, %v1327
          %v2708 = vpop.permute.xlu0 %2707
          %2711 = vset.pattern.permute.xlu0 0
          %2712 = vperm.xlu0 %2711, %v1328
          %v2713 = vpop.permute.xlu0 %2712
          %2716 = vset.pattern.permute.xlu0 0
          %2717 = vperm.xlu0 %2716, %v1329
          %v2718 = vpop.permute.xlu0 %2717
          %2721 = vset.pattern.permute.xlu0 0
          %2722 = vperm.xlu0 %2721, %v1330
          %v2723 = vpop.permute.xlu0 %2722
          %2726 = vset.pattern.permute.xlu0 0
          %2727 = vperm.xlu0 %2726, %v1331
          %v2728 = vpop.permute.xlu0 %2727
          %2731 = vset.pattern.permute.xlu0 0
          %2732 = vperm.xlu0 %2731, %v1332
          %v2733 = vpop.permute.xlu0 %2732
          %2736 = vset.pattern.permute.xlu0 0
          %2737 = vperm.xlu0 %2736, %v1333
          %v2738 = vpop.permute.xlu0 %2737
          %2741 = vset.pattern.permute.xlu0 0
          %2742 = vperm.xlu0 %2741, %v1334
          %v2743 = vpop.permute.xlu0 %2742
          %2746 = vset.pattern.permute.xlu0 0
          %2747 = vperm.xlu0 %2746, %v1335
          %v2748 = vpop.permute.xlu0 %2747
          %2751 = vset.pattern.permute.xlu0 0
          %2752 = vperm.xlu0 %2751, %v1336
          %v2753 = vpop.permute.xlu0 %2752
          %2756 = vset.pattern.permute.xlu0 0
          %2757 = vperm.xlu0 %2756, %v1337
          %v2758 = vpop.permute.xlu0 %2757
          %2761 = vset.pattern.permute.xlu0 0
          %2762 = vperm.xlu0 %2761, %v1338
          %v2763 = vpop.permute.xlu0 %2762
          %2766 = vset.pattern.permute.xlu0 0
          %2767 = vperm.xlu0 %2766, %v1339
          %v2768 = vpop.permute.xlu0 %2767
          %2771 = vset.pattern.permute.xlu0 0
          %2772 = vperm.xlu0 %2771, %v1340
          %v2773 = vpop.permute.xlu0 %2772
          %2776 = vset.pattern.permute.xlu0 0
          %2777 = vperm.xlu0 %2776, %v1341
          %v2778 = vpop.permute.xlu0 %2777
          %2781 = vset.pattern.permute.xlu0 0
          %2782 = vperm.xlu0 %2781, %v1342
          %v2783 = vpop.permute.xlu0 %2782
          %2786 = vset.pattern.permute.xlu0 0
          %2787 = vperm.xlu0 %2786, %v1343
          %v2788 = vpop.permute.xlu0 %2787
          %2791 = vset.pattern.permute.xlu0 0
          %2792 = vperm.xlu0 %2791, %v1344
          %v2793 = vpop.permute.xlu0 %2792
          %2796 = vset.pattern.permute.xlu0 0
          %2797 = vperm.xlu0 %2796, %v1345
          %v2798 = vpop.permute.xlu0 %2797
          %2801 = vset.pattern.permute.xlu0 0
          %2802 = vperm.xlu0 %2801, %v1346
          %v2803 = vpop.permute.xlu0 %2802
          %2806 = vset.pattern.permute.xlu0 0
          %2807 = vperm.xlu0 %2806, %v1347
          %v2808 = vpop.permute.xlu0 %2807
          %2811 = vset.pattern.permute.xlu0 0
          %2812 = vperm.xlu0 %2811, %v1348
          %v2813 = vpop.permute.xlu0 %2812
          %v2815 = vmul.f32 %v2658, %v2529
          %v2816 = vmul.f32 %v2663, %v2532
          %v2817 = vmul.f32 %v2668, %v2537
          %v2818 = vmul.f32 %v2673, %v2540
          %v2819 = vmul.f32 %v2678, %v2545
          %v2820 = vmul.f32 %v2683, %v2548
          %v2821 = vmul.f32 %v2688, %v2553
          %v2822 = vmul.f32 %v2693, %v2556
          %v2823 = vmul.f32 %v2698, %v2561
          %v2824 = vmul.f32 %v2703, %v2564
          %v2825 = vmul.f32 %v2708, %v2569
          %v2826 = vmul.f32 %v2713, %v2572
          %v2827 = vmul.f32 %v2718, %v2577
          %v2828 = vmul.f32 %v2723, %v2580
          %v2829 = vmul.f32 %v2728, %v2585
          %v2830 = vmul.f32 %v2733, %v2588
          %v2831 = vmul.f32 %v2738, %v2593
          %v2832 = vmul.f32 %v2743, %v2596
          %v2833 = vmul.f32 %v2748, %v2601
          %v2834 = vmul.f32 %v2753, %v2604
          %v2835 = vmul.f32 %v2758, %v2609
          %v2836 = vmul.f32 %v2763, %v2612
          %v2837 = vmul.f32 %v2768, %v2617
          %v2838 = vmul.f32 %v2773, %v2620
          %v2839 = vmul.f32 %v2778, %v2625
          %v2840 = vmul.f32 %v2783, %v2628
          %v2841 = vmul.f32 %v2788, %v2633
          %v2842 = vmul.f32 %v2793, %v2636
          %v2843 = vmul.f32 %v2798, %v2641
          %v2844 = vmul.f32 %v2803, %v2644
          %v2845 = vmul.f32 %v2808, %v2649
          %v2846 = vmul.f32 %v2813, %v2652
          %v2847 = vpack.c.bf16 %v2816, %v2815
          %v2848 = vpack.c.bf16 %v2818, %v2817
          %v2849 = vpack.c.bf16 %v2820, %v2819
          %v2850 = vpack.c.bf16 %v2822, %v2821
          %v2851 = vpack.c.bf16 %v2824, %v2823
          %v2852 = vpack.c.bf16 %v2826, %v2825
          %v2853 = vpack.c.bf16 %v2828, %v2827
          %v2854 = vpack.c.bf16 %v2830, %v2829
          %v2855 = vpack.c.bf16 %v2832, %v2831
          %v2856 = vpack.c.bf16 %v2834, %v2833
          %v2857 = vpack.c.bf16 %v2836, %v2835
          %v2858 = vpack.c.bf16 %v2838, %v2837
          %v2859 = vpack.c.bf16 %v2840, %v2839
          %v2860 = vpack.c.bf16 %v2842, %v2841
          %v2861 = vpack.c.bf16 %v2844, %v2843
          %v2862 = vpack.c.bf16 %v2846, %v2845
          %v2879 = vunpack.c.l.b16 %v2847
          %v2880 = vunpack.c.h.b16 %v2847
          %v2881 = vunpack.c.l.b16 %v2848
          %v2882 = vunpack.c.h.b16 %v2848
          %v2883 = vunpack.c.l.b16 %v2849
          %v2884 = vunpack.c.h.b16 %v2849
          %v2885 = vunpack.c.l.b16 %v2850
          %v2886 = vunpack.c.h.b16 %v2850
          %v2887 = vunpack.c.l.b16 %v2851
          %v2888 = vunpack.c.h.b16 %v2851
          %v2889 = vunpack.c.l.b16 %v2852
          %v2890 = vunpack.c.h.b16 %v2852
          %v2891 = vunpack.c.l.b16 %v2853
          %v2892 = vunpack.c.h.b16 %v2853
          %v2893 = vunpack.c.l.b16 %v2854
          %v2894 = vunpack.c.h.b16 %v2854
          %v2895 = vunpack.c.l.b16 %v2855
          %v2896 = vunpack.c.h.b16 %v2855
          %v2897 = vunpack.c.l.b16 %v2856
          %v2898 = vunpack.c.h.b16 %v2856
          %v2899 = vunpack.c.l.b16 %v2857
          %v2900 = vunpack.c.h.b16 %v2857
          %v2901 = vunpack.c.l.b16 %v2858
          %v2902 = vunpack.c.h.b16 %v2858
          %v2903 = vunpack.c.l.b16 %v2859
          %v2904 = vunpack.c.h.b16 %v2859
          %v2905 = vunpack.c.l.b16 %v2860
          %v2906 = vunpack.c.h.b16 %v2860
          %v2907 = vunpack.c.l.b16 %v2861
          %v2908 = vunpack.c.h.b16 %v2861
          %v2909 = vunpack.c.l.b16 %v2862
          %v2910 = vunpack.c.h.b16 %v2862
          %v2911 = vpack.c.b16 %v2879, %v2879
          %v2912 = vpack.c.b16 %v2880, %v2880
          %v2913 = vpack.c.b16 %v2881, %v2881
          %v2914 = vpack.c.b16 %v2882, %v2882
          %v2915 = vpack.c.b16 %v2883, %v2883
          %v2916 = vpack.c.b16 %v2884, %v2884
          %v2917 = vpack.c.b16 %v2885, %v2885
          %v2918 = vpack.c.b16 %v2886, %v2886
          %v2919 = vpack.c.b16 %v2887, %v2887
          %v2920 = vpack.c.b16 %v2888, %v2888
          %v2921 = vpack.c.b16 %v2889, %v2889
          %v2922 = vpack.c.b16 %v2890, %v2890
          %v2923 = vpack.c.b16 %v2891, %v2891
          %v2924 = vpack.c.b16 %v2892, %v2892
          %v2925 = vpack.c.b16 %v2893, %v2893
          %v2926 = vpack.c.b16 %v2894, %v2894
          %v2927 = vpack.c.b16 %v2895, %v2895
          %v2928 = vpack.c.b16 %v2896, %v2896
          %v2929 = vpack.c.b16 %v2897, %v2897
          %v2930 = vpack.c.b16 %v2898, %v2898
          %v2931 = vpack.c.b16 %v2899, %v2899
          %v2932 = vpack.c.b16 %v2900, %v2900
          %v2933 = vpack.c.b16 %v2901, %v2901
          %v2934 = vpack.c.b16 %v2902, %v2902
          %v2935 = vpack.c.b16 %v2903, %v2903
          %v2936 = vpack.c.b16 %v2904, %v2904
          %v2937 = vpack.c.b16 %v2905, %v2905
          %v2938 = vpack.c.b16 %v2906, %v2906
          %v2939 = vpack.c.b16 %v2907, %v2907
          %v2940 = vpack.c.b16 %v2908, %v2908
          %v2941 = vpack.c.b16 %v2909, %v2909
          %v2942 = vpack.c.b16 %v2910, %v2910
          %2975 = vst [vmem:[%s484] sm:$0xf] %v2911
          %2976 = vst [vmem:[%s484 + $0x4] sm:$0xf] %v2912
          %2977 = vst [vmem:[%s484 + $0x8] sm:$0xf] %v2913
          %2978 = vst [vmem:[%s484 + $0xc] sm:$0xf] %v2914
          %2979 = vst [vmem:[%s484 + $0x10] sm:$0xf] %v2915
          %2980 = vst [vmem:[%s484 + $0x14] sm:$0xf] %v2916
          %2981 = vst [vmem:[%s484 + $0x18] sm:$0xf] %v2917
          %2982 = vst [vmem:[%s484 + $0x1c] sm:$0xf] %v2918
          %2983 = vst [vmem:[%s484 + $0x20] sm:$0xf] %v2919
          %2984 = vst [vmem:[%s484 + $0x24] sm:$0xf] %v2920
          %2985 = vst [vmem:[%s484 + $0x28] sm:$0xf] %v2921
          %2986 = vst [vmem:[%s484 + $0x2c] sm:$0xf] %v2922
          %2987 = vst [vmem:[%s484 + $0x30] sm:$0xf] %v2923
          %2988 = vst [vmem:[%s484 + $0x34] sm:$0xf] %v2924
          %2989 = vst [vmem:[%s484 + $0x38] sm:$0xf] %v2925
          %2990 = vst [vmem:[%s484 + $0x3c] sm:$0xf] %v2926
          %2991 = vst [vmem:[%s484 + $0x40] sm:$0xf] %v2927
          %2992 = vst [vmem:[%s484 + $0x44] sm:$0xf] %v2928
          %2993 = vst [vmem:[%s484 + $0x48] sm:$0xf] %v2929
          %2994 = vst [vmem:[%s484 + $0x4c] sm:$0xf] %v2930
          %2995 = vst [vmem:[%s484 + $0x50] sm:$0xf] %v2931
          %2996 = vst [vmem:[%s484 + $0x54] sm:$0xf] %v2932
          %2997 = vst [vmem:[%s484 + $0x58] sm:$0xf] %v2933
          %2998 = vst [vmem:[%s484 + $0x5c] sm:$0xf] %v2934
          %2999 = vst [vmem:[%s484 + $0x60] sm:$0xf] %v2935
          %3000 = vst [vmem:[%s484 + $0x64] sm:$0xf] %v2936
          %3001 = vst [vmem:[%s484 + $0x68] sm:$0xf] %v2937
          %3002 = vst [vmem:[%s484 + $0x6c] sm:$0xf] %v2938
          %3003 = vst [vmem:[%s484 + $0x70] sm:$0xf] %v2939
          %3004 = vst [vmem:[%s484 + $0x74] sm:$0xf] %v2940
          %3005 = vst [vmem:[%s484 + $0x78] sm:$0xf] %v2941
          %3006 = vst [vmem:[%s484 + $0x7c] sm:$0xf] %v2942
        $region80: #{tpu_custom_call.1} parent=51 // pred_fallthru
          _
        %s3007 = sand.u32 %s242, 1
        %s3008 = scalar_lea.sflag [#allocation5], %s3007
        %s3009 = sand.u32 %s242, 1
        %s3010 = smul.addr %s3009, 128
        %s3011 = scalar_lea.vmem [#allocation12], %s3010
        %s3012 = sand.u32 %s268, 1
        %s3013 = scalar_lea.sflag [#allocation14], %s3012
        %s3014 = sand.u32 %s268, 1
        %s3015 = smul.addr %s3014, 128
        %s3016 = scalar_lea.vmem [#allocation13], %s3015
        // Predicated region
        $region81: #{tpu_custom_call.1} parent=51 // pred_check
          %p3017 = pneg %p252
        $region82: #{tpu_custom_call.1} parent=51 // pred_check_branch
          %3019 = sbr.rel (%p3017) target = $region84
        $region83: #{tpu_custom_call.1} parent=51 // pred_region
          %s3020 = smul.u32 32, %s36
          %s3022 = ssub.s32 2048, 2048
          %3023 = vsyncadd %s3008, %s3022
          %s3024 = smul.addr %s3020, 64
          %s3025 = scalar_lea.hbm %s8, %s3024
          %s3026 = sshll.u32 %s3011, 4
          %s3027 = int_to_ptr.vmem [resolvable:$true] %s3026
          %3032 = dma.vmem_to_hbm [thread:$0]  %s3027, 2048, %s3025, %s3008, 64, 64, 4
        $region84: #{tpu_custom_call.1} parent=51 // pred_fallthru
          _
        // Predicated region
        $region85: #{tpu_custom_call.1} parent=51 // pred_check
          %p3033 = pneg %p278
        $region86: #{tpu_custom_call.1} parent=51 // pred_check_branch
          %3035 = sbr.rel (%p3033) target = $region88
        $region87: #{tpu_custom_call.1} parent=51 // pred_region
          %s3036 = smul.u32 32, %s36
          %s3038 = ssub.s32 2048, 2048
          %3039 = vsyncadd %s3013, %s3038
          %s3040 = smul.addr %s3036, 64
          %s3041 = scalar_lea.hbm %s9, %s3040
          %s3042 = sshll.u32 %s3016, 4
          %s3043 = int_to_ptr.vmem [resolvable:$true] %s3042
          %3048 = dma.vmem_to_hbm [thread:$0]  %s3043, 2048, %s3041, %s3013, 64, 64, 4
        $region88: #{tpu_custom_call.1} parent=51 // pred_fallthru
          _
      $region52: #{tpu_custom_call.1} parent=5 // pred_fallthru
        _
      %p3049 = scmp.le.s32.totalorder 2, %s27
      // Predicated region
      $region89: #{tpu_custom_call.1} parent=5 // pred_check
        %p3050 = pneg %p3049
      $region90: #{tpu_custom_call.1} parent=5 // pred_check_branch
        %3052 = sbr.rel (%p3050) target = $region92
      $region91: #{tpu_custom_call.1} parent=5 // pred_region
        %s3053 = ssub.s32 %s27, 2
        // Predicated region
        $region93: #{tpu_custom_call.1} parent=91 // pred_check
          %p3054 = pneg %p258
        $region94: #{tpu_custom_call.1} parent=91 // pred_check_branch
          %3056 = sbr.rel (%p3054) target = $region96
        $region95: #{tpu_custom_call.1} parent=91 // pred_region
          %s3057 = sand.u32 %s243, 1
          %s3058 = scalar_lea.sflag [#allocation5], %s3057
          %s3059 = sand.u32 %s243, 1
          %s3060 = smul.addr %s3059, 128
          %s3061 = scalar_lea.vmem [#allocation12], %s3060
          %3062 = dma.done %s3058, 2048
        $region96: #{tpu_custom_call.1} parent=91 // pred_fallthru
          _
        // Predicated region
        $region97: #{tpu_custom_call.1} parent=91 // pred_check
          %p3063 = pneg %p284
        $region98: #{tpu_custom_call.1} parent=91 // pred_check_branch
          %3065 = sbr.rel (%p3063) target = $region100
        $region99: #{tpu_custom_call.1} parent=91 // pred_region
          %s3066 = sand.u32 %s269, 1
          %s3067 = scalar_lea.sflag [#allocation14], %s3066
          %s3068 = sand.u32 %s269, 1
          %s3069 = smul.addr %s3068, 128
          %s3070 = scalar_lea.vmem [#allocation13], %s3069
          %3071 = dma.done %s3067, 2048
        $region100: #{tpu_custom_call.1} parent=91 // pred_fallthru
          _
      $region92: #{tpu_custom_call.1} parent=5 // pred_fallthru
        _
    $region6: #{tpu_custom_call.1} parent=1 // loop_footer
      %s31 = sadd.s32 1, %s27
    $region7: #{tpu_custom_call.1} parent=1 // loop_footer_branch
      %26 = sbr.rel target = $region3
    $region8: #{tpu_custom_call.1} parent=1 // loop_exit
      _
    %3072 = vsyncpa [#allocation4], 1
    %s3073 = scalar_lea.sflag [#allocation4], 1
    %3074 = vsyncpa %s3073, 1
    %3075 = vsyncpa [#allocation7], 1
    %3076 = vsyncpa [#allocation10], 1
    %3077 = vsyncpa [#allocation5], 1
    %s3078 = scalar_lea.sflag [#allocation5], 1
    %3079 = vsyncpa %s3078, 1
    %3080 = vsyncpa [#allocation14], 1
    %s3081 = scalar_lea.sflag [#allocation14], 1
    %3082 = vsyncpa %s3081, 1

</llo_original>
